<compile_context>
chip_gen: v7x
topology: tpu7x:2x2x1
jax: 0.10.0
libtpu: 0.0.40
codegen_flags: <defaults>
</compile_context>

<pallas_src>
import functools

import jax
import jax.numpy as jnp
from jax.experimental import pallas as pl
from jax.experimental.pallas import tpu as pltpu

LANE = 128


def _round_up(x, m):
    return (x + m - 1) // m * m


def cnn_classifier_kernel(emb_ref,
                          w2_ref, b2_ref,
                          w3_ref, b3_ref,
                          w4_ref, b4_ref,
                          fcw_ref, fcb_ref,
                          ow_ref, ob_ref,
                          out_ref,
                          feats_ref,
                          *, widths, f_pad):
    TB, L, Vp = emb_ref.shape
    # One lane-dense 2-D LHS for every conv matmul: M = TB*L.
    emb2d = emb_ref[...].reshape(TB * L, Vp)          # bf16 (compute dtype)

    def conv_relu_global_maxpool(wflat_ref, b_ref, K, offset):
        # wflat_ref: (Vp, K*Fp) — lane-block k holds the k-th conv tap weights.
        # Single MXU matmul per filter width (M=TB*L, Kdim=Vp, N=K*Fp).
        z = jnp.dot(emb2d, wflat_ref[...],
                    preferred_element_type=jnp.float32)        # (TB*L, K*Fp) f32
        T = L - K + 1
        acc = jnp.zeros((TB, T, f_pad), jnp.float32)
        for k in range(K):                                     # static shift-and-add
            zk = z[:, k * f_pad:(k + 1) * f_pad].reshape(TB, L, f_pad)
            acc = acc + zk[:, k:k + T, :]
        pooled = jnp.max(acc, axis=1)                          # global max over time
        # Bias after the max (max(x+b) == max(x)+b), then ReLU — matches torch.
        pooled = jnp.maximum(pooled + b_ref[...], 0.0)         # (TB, Fp) f32
        feats_ref[:, offset:offset + f_pad] = pooled.astype(feats_ref.dtype)

    conv_refs = ((w2_ref, b2_ref), (w3_ref, b3_ref), (w4_ref, b4_ref))
    for i, (K, (w_ref, b_ref)) in enumerate(zip(widths, conv_refs)):
        conv_relu_global_maxpool(w_ref, b_ref, K, i * f_pad)

    feats = feats_ref[...]                                     # (TB, 3*Fp) bf16
    h = jnp.dot(feats, fcw_ref[...],
                preferred_element_type=jnp.float32) + fcb_ref[...]
    h = jnp.maximum(h, 0.0).astype(feats.dtype)                # F.relu(self.fc(x))
    logits = jnp.dot(h, ow_ref[...],
                     preferred_element_type=jnp.float32) + ob_ref[...]
    out_ref[...] = logits.astype(out_ref.dtype)                # self.output(x)


def cnn_classifier_forward(token_ids, params, *, tb=8):
    """token_ids: (B, L) int32. Returns logits (B, n_labels) float32."""
    emb_matrix = params["emb_matrix"]                # (vocab, Vp) bf16, row 0 zeroed
    B, L = token_ids.shape
    Vp = emb_matrix.shape[1]
    f_pad = params["f_pad"]
    widths = params["widths"]
    n_labels = params["n_labels"]
    n_pad = params["ob"].shape[-1]

    # Embedding lookup (nn.Embedding, padding_idx=0 handled by zeroed row 0).
    # TODO(synk): fuse this gather into the kernel (scalar-prefetched token ids
    # + per-row HBM->VMEM DMA from an ANY-space emb_matrix) to avoid the HBM
    # write+read of the (B, L, Vp) activation at production sizes.
    emb = jnp.take(emb_matrix, token_ids, axis=0)    # (B, L, Vp) bf16

    # Pad batch to a multiple of the batch tile; extra rows are sliced off.
    B_pad = _round_up(max(B, tb), tb)
    if B_pad != B:
        emb = jnp.pad(emb, ((0, B_pad - B), (0, 0), (0, 0)))

    grid = (B_pad // tb,)

    def full(shape):
        return pl.BlockSpec(shape, lambda b: (0,) * len(shape))

    kernel = functools.partial(cnn_classifier_kernel, widths=widths, f_pad=f_pad)

    out = pl.pallas_call(
        kernel,
        out_shape=jax.ShapeDtypeStruct((B_pad, n_pad), jnp.float32),
        grid=grid,
        in_specs=[
            pl.BlockSpec((tb, L, Vp), lambda b: (b, 0, 0)),    # batch-tiled activations
            full(params["w2"].shape), full(params["b2"].shape),
            full(params["w3"].shape), full(params["b3"].shape),
            full(params["w4"].shape), full(params["b4"].shape),
            full(params["fcw"].shape), full(params["fcb"].shape),
            full(params["ow"].shape), full(params["ob"].shape),
        ],
        out_specs=pl.BlockSpec((tb, n_pad), lambda b: (b, 0)),
        scratch_shapes=[pltpu.VMEM((tb, len(widths) * f_pad), emb_matrix.dtype)],
        compiler_params=pltpu.CompilerParams(
            dimension_semantics=("parallel",),     # shard batch across TCs on v7x
            vmem_limit_bytes=48 << 20,             # headroom on v7x's 64 MiB VMEM
        ),
    )(emb, params["w2"], params["b2"], params["w3"], params["b3"],
      params["w4"], params["b4"], params["fcw"], params["fcb"],
      params["ow"], params["ob"])

    return out[:B, :n_labels]


def make_params(key, vocab_size, vector_size, filters_count, filters_width,
                dimensions, n_labels, compute_dtype=jnp.bfloat16):
    v_pad = _round_up(vector_size, LANE)
    f_pad = _round_up(filters_count, LANE)
    d_pad = _round_up(dimensions, LANE)
    n_pad = _round_up(n_labels, LANE)
    cat_pad = f_pad * len(filters_width)

    keys = jax.random.split(key, 2 + 2 * len(filters_width) + 4)
    ki = iter(keys)

    # nn.Embedding.from_pretrained(torch.randn(...)) with row 0 zeroed (padding_idx=0).
    emb = jax.random.normal(next(ki), (vocab_size, vector_size), jnp.float32)
    emb = emb.at[0].set(0.0)
    emb = jnp.pad(emb, ((0, 0), (0, v_pad - vector_size)))     # zero-pad V -> Vp

    params = {
        "emb_matrix": emb.astype(compute_dtype),
        "widths": tuple(filters_width),
        "f_pad": f_pad,
        "n_labels": n_labels,
    }

    # Conv1d weights: torch shape (F, V, K); kernel wants (Vp, K*Fp) with the
    # K taps flattened onto the lane axis (tap k -> columns [k*Fp, (k+1)*Fp)).
    for w in filters_width:
        wt = jax.random.normal(next(ki), (filters_count, vector_size, w),
                               jnp.float32) * 0.1
        bt = jax.random.normal(next(ki), (filters_count,), jnp.float32) * 0.1
        wk = jnp.transpose(wt, (2, 1, 0))                                  # (K, V, F)
        wk = jnp.pad(wk, ((0, 0), (0, v_pad - vector_size),
                          (0, f_pad - filters_count)))                     # (K, Vp, Fp)
        wflat = jnp.transpose(wk, (1, 0, 2)).reshape(v_pad, w * f_pad)     # (Vp, K*Fp)
        params[f"w{w}"] = wflat.astype(compute_dtype)
        params[f"b{w}"] = jnp.pad(bt, (0, f_pad - filters_count)).reshape(1, f_pad)

    # nn.Linear stores (out, in); kernel uses x @ W.T. Map the rows of W.T into
    # the padded per-width feature layout (width i occupies lanes [i*Fp, i*Fp+F)).
    fcw = jax.random.normal(next(ki), (dimensions,
                                       filters_count * len(filters_width)),
                            jnp.float32) * 0.1
    fcb = jax.random.normal(next(ki), (dimensions,), jnp.float32) * 0.1
    fcw_t = fcw.T                                                          # (3F, dims)
    fcw_pad = jnp.zeros((cat_pad, d_pad), jnp.float32)
    for i in range(len(filters_width)):
        fcw_pad = fcw_pad.at[i * f_pad:i * f_pad + filters_count, :dimensions].set(
            fcw_t[i * filters_count:(i + 1) * filters_count, :])
    params["fcw"] = fcw_pad.astype(compute_dtype)
    params["fcb"] = jnp.pad(fcb, (0, d_pad - dimensions)).reshape(1, d_pad)

    ow = jax.random.normal(next(ki), (n_labels, dimensions), jnp.float32) * 0.1
    ob = jax.random.normal(next(ki), (n_labels,), jnp.float32) * 0.1
    ow_pad = jnp.zeros((d_pad, n_pad), jnp.float32)
    ow_pad = ow_pad.at[:dimensions, :n_labels].set(ow.T)
    params["ow"] = ow_pad.astype(compute_dtype)
    params["ob"] = jnp.pad(ob, (0, n_pad - n_labels)).reshape(1, n_pad)
    return params


def reference_forward(token_ids, params):
    """Pure-JAX reference mirroring the PyTorch forward (same dtype policy as kernel)."""
    emb = jnp.take(params["emb_matrix"], token_ids, axis=0)    # (B, L, Vp)
    B, L, Vp = emb.shape
    f_pad = params["f_pad"]
    pooled = []
    for w in params["widths"]:
        wflat = params[f"w{w}"]                                # (Vp, K*Fp)
        z = jnp.einsum("blv,vn->bln", emb, wflat,
                       preferred_element_type=jnp.float32)
        T = L - w + 1
        acc = sum(z[:, k:k + T, k * f_pad:(k + 1) * f_pad] for k in range(w))
        p = jnp.max(acc, axis=1) + params[f"b{w}"]
        pooled.append(jnp.maximum(p, 0.0))
    feats = jnp.concatenate(pooled, axis=-1).astype(emb.dtype)
    h = jnp.dot(feats, params["fcw"],
                preferred_element_type=jnp.float32) + params["fcb"]
    h = jnp.maximum(h, 0.0).astype(emb.dtype)
    logits = jnp.dot(h, params["ow"],
                     preferred_element_type=jnp.float32) + params["ob"]
    return logits[:, :params["n_labels"]]


if __name__ == "__main__":
    # Small, module-consistent shapes (original: V=300, F=100, dims=128).
    B, L = 2, 8                # batch, sequence length
    VOCAB = 50
    VECTOR_SIZE = 32
    FILTERS = 16               # filters_count
    WIDTHS = [2, 3, 4]
    DIMS = 32                  # dimensions
    N_LABELS = 4

    key = jax.random.PRNGKey(0)
    k_params, k_tokens = jax.random.split(key)
    params = make_params(k_params, VOCAB, VECTOR_SIZE, FILTERS, WIDTHS,
                         DIMS, N_LABELS)
    token_ids = jax.random.randint(k_tokens, (B, L), 0, VOCAB, dtype=jnp.int32)

    logits = cnn_classifier_forward(token_ids, params)
    logits = jax.block_until_ready(logits)

    ref = reference_forward(token_ids, params)
    assert logits.shape == (B, N_LABELS)
    assert jnp.allclose(logits, ref, atol=1e-2, rtol=1e-2)

    print("KERNEL_OK")
</pallas_src>

<mosaic_0001>
module attributes {stable_mosaic.version = 11 : i64} {
  func.func @cnn_classifier_kernel(%arg0: i32, %arg1: memref<8x8x128xbf16, #tpu.memory_space<vmem>>, %arg2: memref<128x256xbf16, #tpu.memory_space<vmem>>, %arg3: memref<1x128xf32, #tpu.memory_space<vmem>>, %arg4: memref<128x384xbf16, #tpu.memory_space<vmem>>, %arg5: memref<1x128xf32, #tpu.memory_space<vmem>>, %arg6: memref<128x512xbf16, #tpu.memory_space<vmem>>, %arg7: memref<1x128xf32, #tpu.memory_space<vmem>>, %arg8: memref<384x128xbf16, #tpu.memory_space<vmem>>, %arg9: memref<1x128xf32, #tpu.memory_space<vmem>>, %arg10: memref<128x128xbf16, #tpu.memory_space<vmem>>, %arg11: memref<1x128xf32, #tpu.memory_space<vmem>>, %arg12: memref<8x128xf32, #tpu.memory_space<vmem>>, %arg13: memref<8x384xbf16, #tpu.memory_space<vmem>>) attributes {dimension_semantics = [#tpu.dimension_semantics<parallel>], iteration_bounds = array<i64: 1>, scalar_prefetch = 0 : i64, scratch_operands = 1 : i64, tpu.core_type = #tpu.core_type<tc>, window_params = [{transform_indices = @transform_0, window_bounds = array<i64: 8, 8, 128>}, {pipeline_mode = #tpu.pipeline_mode<synchronous>, transform_indices = @transform_1, window_bounds = array<i64: 128, 256>}, {pipeline_mode = #tpu.pipeline_mode<synchronous>, transform_indices = @transform_2, window_bounds = array<i64: 1, 128>}, {pipeline_mode = #tpu.pipeline_mode<synchronous>, transform_indices = @transform_3, window_bounds = array<i64: 128, 384>}, {pipeline_mode = #tpu.pipeline_mode<synchronous>, transform_indices = @transform_4, window_bounds = array<i64: 1, 128>}, {pipeline_mode = #tpu.pipeline_mode<synchronous>, transform_indices = @transform_5, window_bounds = array<i64: 128, 512>}, {pipeline_mode = #tpu.pipeline_mode<synchronous>, transform_indices = @transform_6, window_bounds = array<i64: 1, 128>}, {pipeline_mode = #tpu.pipeline_mode<synchronous>, transform_indices = @transform_7, window_bounds = array<i64: 384, 128>}, {pipeline_mode = #tpu.pipeline_mode<synchronous>, transform_indices = @transform_8, window_bounds = array<i64: 1, 128>}, {pipeline_mode = #tpu.pipeline_mode<synchronous>, transform_indices = @transform_9, window_bounds = array<i64: 128, 128>}, {pipeline_mode = #tpu.pipeline_mode<synchronous>, transform_indices = @transform_10, window_bounds = array<i64: 1, 128>}, {transform_indices = @transform_11, window_bounds = array<i64: 8, 128>}]} {
    %c0 = arith.constant 0 : index
    %c0_0 = arith.constant 0 : index
    %c0_1 = arith.constant 0 : index
    %0 = vector.load %arg1[%c0, %c0_0, %c0_1] : memref<8x8x128xbf16, #tpu.memory_space<vmem>>, vector<8x8x128xbf16>
    %1 = vector.shape_cast %0 : vector<8x8x128xbf16> to vector<64x128xbf16>
    %c0_2 = arith.constant 0 : index
    %c0_3 = arith.constant 0 : index
    %2 = vector.load %arg2[%c0_2, %c0_3] : memref<128x256xbf16, #tpu.memory_space<vmem>>, vector<128x256xbf16>
    %cst = arith.constant dense<0.000000e+00> : vector<64x256xf32>
    %3 = tpu.matmul %1, %2, %cst {dimension_numbers = #tpu.dot_dimension_numbers<[1], [0], [0], [1], [0, 0, 1, 1], [], []>} : vector<64x128xbf16>, vector<128x256xbf16>, vector<64x256xf32> -> vector<64x256xf32>
    %cst_4 = arith.constant 0.000000e+00 : f32
    %4 = vector.broadcast %cst_4 : f32 to vector<8x7x128xf32>
    %5 = vector.extract_strided_slice %3 {offsets = [0, 0], sizes = [64, 128], strides = [1, 1]} : vector<64x256xf32> to vector<64x128xf32>
    %6 = vector.shape_cast %5 : vector<64x128xf32> to vector<8x8x128xf32>
    %7 = vector.extract_strided_slice %6 {offsets = [0, 0, 0], sizes = [8, 7, 128], strides = [1, 1, 1]} : vector<8x8x128xf32> to vector<8x7x128xf32>
    %8 = arith.addf %4, %7 : vector<8x7x128xf32>
    %9 = vector.extract_strided_slice %3 {offsets = [0, 128], sizes = [64, 128], strides = [1, 1]} : vector<64x256xf32> to vector<64x128xf32>
    %10 = vector.shape_cast %9 : vector<64x128xf32> to vector<8x8x128xf32>
    %11 = vector.extract_strided_slice %10 {offsets = [0, 1, 0], sizes = [8, 7, 128], strides = [1, 1, 1]} : vector<8x8x128xf32> to vector<8x7x128xf32>
    %12 = arith.addf %8, %11 : vector<8x7x128xf32>
    %cst_5 = arith.constant dense<0xFF800000> : vector<8x128xf32>
    %13 = vector.multi_reduction <maximumf>, %12, %cst_5 [1] : vector<8x7x128xf32> to vector<8x128xf32>
    %c0_6 = arith.constant 0 : index
    %c0_7 = arith.constant 0 : index
    %14 = vector.load %arg3[%c0_6, %c0_7] : memref<1x128xf32, #tpu.memory_space<vmem>>, vector<1x128xf32>
    %15 = vector.broadcast %14 : vector<1x128xf32> to vector<8x128xf32>
    %16 = arith.addf %13, %15 : vector<8x128xf32>
    %cst_8 = arith.constant 0.000000e+00 : f32
    %17 = vector.broadcast %cst_8 : f32 to vector<8x128xf32>
    %18 = arith.maximumf %16, %17 : vector<8x128xf32>
    %19 = arith.truncf %18 : vector<8x128xf32> to vector<8x128xbf16>
    %c0_9 = arith.constant 0 : index
    %c0_10 = arith.constant 0 : index
    %20 = vector.load %arg13[%c0_9, %c0_10] : memref<8x384xbf16, #tpu.memory_space<vmem>>, vector<8x128xbf16>
    tpu.vector_store %arg13[%c0_9, %c0_10], %19 {strides = array<i32>} : memref<8x384xbf16, #tpu.memory_space<vmem>>, vector<8x128xbf16>,
    %c0_11 = arith.constant 0 : index
    %c0_12 = arith.constant 0 : index
    %21 = vector.load %arg4[%c0_11, %c0_12] : memref<128x384xbf16, #tpu.memory_space<vmem>>, vector<128x384xbf16>
    %cst_13 = arith.constant dense<0.000000e+00> : vector<64x384xf32>
    %22 = tpu.matmul %1, %21, %cst_13 {dimension_numbers = #tpu.dot_dimension_numbers<[1], [0], [0], [1], [0, 0, 1, 1], [], []>} : vector<64x128xbf16>, vector<128x384xbf16>, vector<64x384xf32> -> vector<64x384xf32>
    %cst_14 = arith.constant 0.000000e+00 : f32
    %23 = vector.broadcast %cst_14 : f32 to vector<8x6x128xf32>
    %24 = vector.extract_strided_slice %22 {offsets = [0, 0], sizes = [64, 128], strides = [1, 1]} : vector<64x384xf32> to vector<64x128xf32>
    %25 = vector.shape_cast %24 : vector<64x128xf32> to vector<8x8x128xf32>
    %26 = vector.extract_strided_slice %25 {offsets = [0, 0, 0], sizes = [8, 6, 128], strides = [1, 1, 1]} : vector<8x8x128xf32> to vector<8x6x128xf32>
    %27 = arith.addf %23, %26 : vector<8x6x128xf32>
    %28 = vector.extract_strided_slice %22 {offsets = [0, 128], sizes = [64, 128], strides = [1, 1]} : vector<64x384xf32> to vector<64x128xf32>
    %29 = vector.shape_cast %28 : vector<64x128xf32> to vector<8x8x128xf32>
    %30 = vector.extract_strided_slice %29 {offsets = [0, 1, 0], sizes = [8, 6, 128], strides = [1, 1, 1]} : vector<8x8x128xf32> to vector<8x6x128xf32>
    %31 = arith.addf %27, %30 : vector<8x6x128xf32>
    %32 = vector.extract_strided_slice %22 {offsets = [0, 256], sizes = [64, 128], strides = [1, 1]} : vector<64x384xf32> to vector<64x128xf32>
    %33 = vector.shape_cast %32 : vector<64x128xf32> to vector<8x8x128xf32>
    %34 = vector.extract_strided_slice %33 {offsets = [0, 2, 0], sizes = [8, 6, 128], strides = [1, 1, 1]} : vector<8x8x128xf32> to vector<8x6x128xf32>
    %35 = arith.addf %31, %34 : vector<8x6x128xf32>
    %cst_15 = arith.constant dense<0xFF800000> : vector<8x128xf32>
    %36 = vector.multi_reduction <maximumf>, %35, %cst_15 [1] : vector<8x6x128xf32> to vector<8x128xf32>
    %c0_16 = arith.constant 0 : index
    %c0_17 = arith.constant 0 : index
    %37 = vector.load %arg5[%c0_16, %c0_17] : memref<1x128xf32, #tpu.memory_space<vmem>>, vector<1x128xf32>
    %38 = vector.broadcast %37 : vector<1x128xf32> to vector<8x128xf32>
    %39 = arith.addf %36, %38 : vector<8x128xf32>
    %cst_18 = arith.constant 0.000000e+00 : f32
    %40 = vector.broadcast %cst_18 : f32 to vector<8x128xf32>
    %41 = arith.maximumf %39, %40 : vector<8x128xf32>
    %42 = arith.truncf %41 : vector<8x128xf32> to vector<8x128xbf16>
    %c0_19 = arith.constant 0 : index
    %c128 = arith.constant 128 : index
    %43 = vector.load %arg13[%c0_19, %c128] : memref<8x384xbf16, #tpu.memory_space<vmem>>, vector<8x128xbf16>
    tpu.vector_store %arg13[%c0_19, %c128], %42 {strides = array<i32>} : memref<8x384xbf16, #tpu.memory_space<vmem>>, vector<8x128xbf16>,
    %c0_20 = arith.constant 0 : index
    %c0_21 = arith.constant 0 : index
    %44 = vector.load %arg6[%c0_20, %c0_21] : memref<128x512xbf16, #tpu.memory_space<vmem>>, vector<128x512xbf16>
    %cst_22 = arith.constant dense<0.000000e+00> : vector<64x512xf32>
    %45 = tpu.matmul %1, %44, %cst_22 {dimension_numbers = #tpu.dot_dimension_numbers<[1], [0], [0], [1], [0, 0, 1, 1], [], []>} : vector<64x128xbf16>, vector<128x512xbf16>, vector<64x512xf32> -> vector<64x512xf32>
    %cst_23 = arith.constant 0.000000e+00 : f32
    %46 = vector.broadcast %cst_23 : f32 to vector<8x5x128xf32>
    %47 = vector.extract_strided_slice %45 {offsets = [0, 0], sizes = [64, 128], strides = [1, 1]} : vector<64x512xf32> to vector<64x128xf32>
    %48 = vector.shape_cast %47 : vector<64x128xf32> to vector<8x8x128xf32>
    %49 = vector.extract_strided_slice %48 {offsets = [0, 0, 0], sizes = [8, 5, 128], strides = [1, 1, 1]} : vector<8x8x128xf32> to vector<8x5x128xf32>
    %50 = arith.addf %46, %49 : vector<8x5x128xf32>
    %51 = vector.extract_strided_slice %45 {offsets = [0, 128], sizes = [64, 128], strides = [1, 1]} : vector<64x512xf32> to vector<64x128xf32>
    %52 = vector.shape_cast %51 : vector<64x128xf32> to vector<8x8x128xf32>
    %53 = vector.extract_strided_slice %52 {offsets = [0, 1, 0], sizes = [8, 5, 128], strides = [1, 1, 1]} : vector<8x8x128xf32> to vector<8x5x128xf32>
    %54 = arith.addf %50, %53 : vector<8x5x128xf32>
    %55 = vector.extract_strided_slice %45 {offsets = [0, 256], sizes = [64, 128], strides = [1, 1]} : vector<64x512xf32> to vector<64x128xf32>
    %56 = vector.shape_cast %55 : vector<64x128xf32> to vector<8x8x128xf32>
    %57 = vector.extract_strided_slice %56 {offsets = [0, 2, 0], sizes = [8, 5, 128], strides = [1, 1, 1]} : vector<8x8x128xf32> to vector<8x5x128xf32>
    %58 = arith.addf %54, %57 : vector<8x5x128xf32>
    %59 = vector.extract_strided_slice %45 {offsets = [0, 384], sizes = [64, 128], strides = [1, 1]} : vector<64x512xf32> to vector<64x128xf32>
    %60 = vector.shape_cast %59 : vector<64x128xf32> to vector<8x8x128xf32>
    %61 = vector.extract_strided_slice %60 {offsets = [0, 3, 0], sizes = [8, 5, 128], strides = [1, 1, 1]} : vector<8x8x128xf32> to vector<8x5x128xf32>
    %62 = arith.addf %58, %61 : vector<8x5x128xf32>
    %cst_24 = arith.constant dense<0xFF800000> : vector<8x128xf32>
    %63 = vector.multi_reduction <maximumf>, %62, %cst_24 [1] : vector<8x5x128xf32> to vector<8x128xf32>
    %c0_25 = arith.constant 0 : index
    %c0_26 = arith.constant 0 : index
    %64 = vector.load %arg7[%c0_25, %c0_26] : memref<1x128xf32, #tpu.memory_space<vmem>>, vector<1x128xf32>
    %65 = vector.broadcast %64 : vector<1x128xf32> to vector<8x128xf32>
    %66 = arith.addf %63, %65 : vector<8x128xf32>
    %cst_27 = arith.constant 0.000000e+00 : f32
    %67 = vector.broadcast %cst_27 : f32 to vector<8x128xf32>
    %68 = arith.maximumf %66, %67 : vector<8x128xf32>
    %69 = arith.truncf %68 : vector<8x128xf32> to vector<8x128xbf16>
    %c0_28 = arith.constant 0 : index
    %c256 = arith.constant 256 : index
    %70 = vector.load %arg13[%c0_28, %c256] : memref<8x384xbf16, #tpu.memory_space<vmem>>, vector<8x128xbf16>
    tpu.vector_store %arg13[%c0_28, %c256], %69 {strides = array<i32>} : memref<8x384xbf16, #tpu.memory_space<vmem>>, vector<8x128xbf16>,
    %c0_29 = arith.constant 0 : index
    %c0_30 = arith.constant 0 : index
    %71 = vector.load %arg13[%c0_29, %c0_30] : memref<8x384xbf16, #tpu.memory_space<vmem>>, vector<8x384xbf16>
    %c0_31 = arith.constant 0 : index
    %c0_32 = arith.constant 0 : index
    %72 = vector.load %arg8[%c0_31, %c0_32] : memref<384x128xbf16, #tpu.memory_space<vmem>>, vector<384x128xbf16>
    %cst_33 = arith.constant dense<0.000000e+00> : vector<8x128xf32>
    %73 = tpu.matmul %71, %72, %cst_33 {dimension_numbers = #tpu.dot_dimension_numbers<[1], [0], [0], [1], [0, 0, 1, 1], [], []>} : vector<8x384xbf16>, vector<384x128xbf16>, vector<8x128xf32> -> vector<8x128xf32>
    %c0_34 = arith.constant 0 : index
    %c0_35 = arith.constant 0 : index
    %74 = vector.load %arg9[%c0_34, %c0_35] : memref<1x128xf32, #tpu.memory_space<vmem>>, vector<1x128xf32>
    %75 = vector.broadcast %74 : vector<1x128xf32> to vector<8x128xf32>
    %76 = arith.addf %73, %75 : vector<8x128xf32>
    %cst_36 = arith.constant 0.000000e+00 : f32
    %77 = vector.broadcast %cst_36 : f32 to vector<8x128xf32>
    %78 = arith.maximumf %76, %77 : vector<8x128xf32>
    %79 = arith.truncf %78 : vector<8x128xf32> to vector<8x128xbf16>
    %c0_37 = arith.constant 0 : index
    %c0_38 = arith.constant 0 : index
    %80 = vector.load %arg10[%c0_37, %c0_38] : memref<128x128xbf16, #tpu.memory_space<vmem>>, vector<128x128xbf16>
    %cst_39 = arith.constant dense<0.000000e+00> : vector<8x128xf32>
    %81 = tpu.matmul %79, %80, %cst_39 {dimension_numbers = #tpu.dot_dimension_numbers<[1], [0], [0], [1], [0, 0, 1, 1], [], []>} : vector<8x128xbf16>, vector<128x128xbf16>, vector<8x128xf32> -> vector<8x128xf32>
    %c0_40 = arith.constant 0 : index
    %c0_41 = arith.constant 0 : index
    %82 = vector.load %arg11[%c0_40, %c0_41] : memref<1x128xf32, #tpu.memory_space<vmem>>, vector<1x128xf32>
    %83 = vector.broadcast %82 : vector<1x128xf32> to vector<8x128xf32>
    %84 = arith.addf %81, %83 : vector<8x128xf32>
    %c0_42 = arith.constant 0 : index
    %c0_43 = arith.constant 0 : index
    %85 = vector.load %arg12[%c0_42, %c0_43] : memref<8x128xf32, #tpu.memory_space<vmem>>, vector<8x128xf32>
    tpu.vector_store %arg12[%c0_42, %c0_43], %84 {strides = array<i32>} : memref<8x128xf32, #tpu.memory_space<vmem>>, vector<8x128xf32>,
    return
  }
  func.func @transform_0(%arg0: i32) -> (i32, i32, i32) {
    %c0_i32 = arith.constant 0 : i32
    %c0_i32_0 = arith.constant 0 : i32
    %c0_i32_1 = arith.constant 0 : i32
    return %arg0, %c0_i32, %c0_i32_0 : i32, i32, i32
  }
  func.func @transform_1(%arg0: i32) -> (i32, i32) {
    %c0_i32 = arith.constant 0 : i32
    %c0_i32_0 = arith.constant 0 : i32
    %c0_i32_1 = arith.constant 0 : i32
    return %c0_i32, %c0_i32_0 : i32, i32
  }
  func.func @transform_2(%arg0: i32) -> (i32, i32) {
    %c0_i32 = arith.constant 0 : i32
    %c0_i32_0 = arith.constant 0 : i32
    %c0_i32_1 = arith.constant 0 : i32
    return %c0_i32, %c0_i32_0 : i32, i32
  }
  func.func @transform_3(%arg0: i32) -> (i32, i32) {
    %c0_i32 = arith.constant 0 : i32
    %c0_i32_0 = arith.constant 0 : i32
    %c0_i32_1 = arith.constant 0 : i32
    return %c0_i32, %c0_i32_0 : i32, i32
  }
  func.func @transform_4(%arg0: i32) -> (i32, i32) {
    %c0_i32 = arith.constant 0 : i32
    %c0_i32_0 = arith.constant 0 : i32
    %c0_i32_1 = arith.constant 0 : i32
    return %c0_i32, %c0_i32_0 : i32, i32
  }
  func.func @transform_5(%arg0: i32) -> (i32, i32) {
    %c0_i32 = arith.constant 0 : i32
    %c0_i32_0 = arith.constant 0 : i32
    %c0_i32_1 = arith.constant 0 : i32
    return %c0_i32, %c0_i32_0 : i32, i32
  }
  func.func @transform_6(%arg0: i32) -> (i32, i32) {
    %c0_i32 = arith.constant 0 : i32
    %c0_i32_0 = arith.constant 0 : i32
    %c0_i32_1 = arith.constant 0 : i32
    return %c0_i32, %c0_i32_0 : i32, i32
  }
  func.func @transform_7(%arg0: i32) -> (i32, i32) {
    %c0_i32 = arith.constant 0 : i32
    %c0_i32_0 = arith.constant 0 : i32
    %c0_i32_1 = arith.constant 0 : i32
    return %c0_i32, %c0_i32_0 : i32, i32
  }
  func.func @transform_8(%arg0: i32) -> (i32, i32) {
    %c0_i32 = arith.constant 0 : i32
    %c0_i32_0 = arith.constant 0 : i32
    %c0_i32_1 = arith.constant 0 : i32
    return %c0_i32, %c0_i32_0 : i32, i32
  }
  func.func @transform_9(%arg0: i32) -> (i32, i32) {
    %c0_i32 = arith.constant 0 : i32
    %c0_i32_0 = arith.constant 0 : i32
    %c0_i32_1 = arith.constant 0 : i32
    return %c0_i32, %c0_i32_0 : i32, i32
  }
  func.func @transform_10(%arg0: i32) -> (i32, i32) {
    %c0_i32 = arith.constant 0 : i32
    %c0_i32_0 = arith.constant 0 : i32
    %c0_i32_1 = arith.constant 0 : i32
    return %c0_i32, %c0_i32_0 : i32, i32
  }
  func.func @transform_11(%arg0: i32) -> (i32, i32) {
    %c0_i32 = arith.constant 0 : i32
    %c0_i32_0 = arith.constant 0 : i32
    return %arg0, %c0_i32 : i32, i32
  }
}

</mosaic_0001>

<llo_original>
// kernel: tpu_custom_call.1
$region0: #{tpu_custom_call.1}
  #allocation0 [shape = 'u32[]', space=smem, size = 0x4, offset = 0x4, fixed_abs, tag = 'smem constant byte address 0x4 - core index']
  #allocation1 [shape = 'u32[144,128]{1,0:T(1,128)}', space=vmem, size = 0x12000, scoped, tag = 'internal scratch']
  #allocation2 [shape = 'bf16[8,384]{1,0:T(8,128)(2,1)}', space=vmem, size = 0x1800, scoped, tag = 'scratch operand']
  %s0 = inlined_call_operand.hbm [shape: bf16[8,8,128], index: 0, kind: input, shape index: {}]
  %s1 = inlined_call_operand.hbm [shape: bf16[128,256], index: 1, kind: input, shape index: {}]
  %s2 = inlined_call_operand.vmem [shape: f32[1,128], index: 2, kind: input, shape index: {}]
  %s3 = inlined_call_operand.hbm [shape: bf16[128,384], index: 3, kind: input, shape index: {}]
  %s4 = inlined_call_operand.vmem [shape: f32[1,128], index: 4, kind: input, shape index: {}]
  %s5 = inlined_call_operand.hbm [shape: bf16[128,512], index: 5, kind: input, shape index: {}]
  %s6 = inlined_call_operand.vmem [shape: f32[1,128], index: 6, kind: input, shape index: {}]
  %s7 = inlined_call_operand.hbm [shape: bf16[384,128], index: 7, kind: input, shape index: {}]
  %s8 = inlined_call_operand.vmem [shape: f32[1,128], index: 8, kind: input, shape index: {}]
  %s9 = inlined_call_operand.hbm [shape: bf16[128,128], index: 9, kind: input, shape index: {}]
  %s10 = inlined_call_operand.vmem [shape: f32[1,128], index: 10, kind: input, shape index: {}]
  %s11 = inlined_call_operand.hbm [shape: f32[8,128], index: 11, kind: output, shape index: {}]
  %s12 = sld [smem:[#allocation0]]
  $region78: #{tpu_custom_call.1} parent=0
    _
  %s14 = ssub.s32 1, %s12
  %s15 = scalar_select 0, %s14, %s12
  $region1: #{tpu_custom_call.1} parent=0
    #allocation3 [shape = 'u8[16384]{0}', space=vmem, size = 0x4000, scoped, tag = 'input window, operand 0, single buffered']
    #allocation4 [shape = 's32[1]{0}', space=sflag, size = 0x4, scoped, tag = 'scoped memory for tpu_custom_call.1']
    #allocation5 [shape = 's32[1]{0}', space=sflag, size = 0x4, scoped, tag = 'scoped memory for tpu_custom_call.1']
    #allocation6 [shape = 'u8[65536]{0}', space=vmem, size = 0x10000, scoped, tag = 'input window, operand 1, single buffered']
    #allocation7 [shape = 's32[1]{0}', space=sflag, size = 0x4, scoped, tag = 'scoped memory for tpu_custom_call.1']
    #allocation8 [shape = 'u8[98304]{0}', space=vmem, size = 0x18000, scoped, tag = 'input window, operand 3, single buffered']
    #allocation9 [shape = 'u8[131072]{0}', space=vmem, size = 0x20000, scoped, tag = 'input window, operand 5, single buffered']
    #allocation10 [shape = 's32[1]{0}', space=sflag, size = 0x4, scoped, tag = 'scoped memory for tpu_custom_call.1']
    #allocation11 [shape = 'u8[98304]{0}', space=vmem, size = 0x18000, scoped, tag = 'input window, operand 7, single buffered']
    #allocation12 [shape = 'u8[32768]{0}', space=vmem, size = 0x8000, scoped, tag = 'input window, operand 9, single buffered']
    #allocation13 [shape = 's32[1]{0}', space=sflag, size = 0x4, scoped, tag = 'scoped memory for tpu_custom_call.1']
    #allocation14 [shape = 'u8[4096]{0}', space=vmem, size = 0x1000, scoped, tag = 'output window, operand 0, single buffered']
    %16 = vsyncpa [#allocation4], 0
    %17 = vsyncpa [#allocation7], 0
    %18 = vsyncpa [#allocation10], 0
    %19 = vsyncpa [#allocation13], 0
    %20 = vsyncpa [#allocation5], 0
    // Predicated region
    $region2: #{tpu_custom_call.1} parent=1 // pred_check
      _
    $region3: #{tpu_custom_call.1} parent=1 // pred_check_branch
      %22 = sbr.rel (0) target = $region5
    $region4: #{tpu_custom_call.1} parent=1 // pred_region
      %s24 = ssub.s32 512, 512
      %25 = vsyncadd [#allocation4], %s24
      %s26 = sshll.u32 [#allocation3], 4
      %s27 = int_to_ptr.vmem [resolvable:$true] %s26
      %32 = dma.hbm_to_vmem [thread:$0]  %s0, 512, %s27, [#allocation4], 64, 64, 4
    $region5: #{tpu_custom_call.1} parent=1 // pred_fallthru
      _
    // Predicated region
    $region6: #{tpu_custom_call.1} parent=1 // pred_check
      _
    $region7: #{tpu_custom_call.1} parent=1 // pred_check_branch
      %34 = sbr.rel (0) target = $region9
    $region8: #{tpu_custom_call.1} parent=1 // pred_region
      %s36 = ssub.s32 2048, 2048
      %37 = vsyncadd [#allocation7], %s36
      %s38 = sshll.u32 [#allocation6], 4
      %s39 = int_to_ptr.vmem [resolvable:$true] %s38
      %44 = dma.hbm_to_vmem [thread:$0]  %s1, 2048, %s39, [#allocation7], 128, 128, 8
    $region9: #{tpu_custom_call.1} parent=1 // pred_fallthru
      _
    // Predicated region
    $region10: #{tpu_custom_call.1} parent=1 // pred_check
      _
    $region11: #{tpu_custom_call.1} parent=1 // pred_check_branch
      %46 = sbr.rel (0) target = $region13
    $region12: #{tpu_custom_call.1} parent=1 // pred_region
      _
    $region13: #{tpu_custom_call.1} parent=1 // pred_fallthru
      _
    // Predicated region
    $region14: #{tpu_custom_call.1} parent=1 // pred_check
      _
    $region15: #{tpu_custom_call.1} parent=1 // pred_check_branch
      %48 = sbr.rel (0) target = $region17
    $region16: #{tpu_custom_call.1} parent=1 // pred_region
      %s50 = ssub.s32 3072, 3072
      %51 = vsyncadd [#allocation7], %s50
      %s52 = sshll.u32 [#allocation8], 4
      %s53 = int_to_ptr.vmem [resolvable:$true] %s52
      %58 = dma.hbm_to_vmem [thread:$0]  %s3, 3072, %s53, [#allocation7], 192, 192, 12
    $region17: #{tpu_custom_call.1} parent=1 // pred_fallthru
      _
    // Predicated region
    $region18: #{tpu_custom_call.1} parent=1 // pred_check
      _
    $region19: #{tpu_custom_call.1} parent=1 // pred_check_branch
      %60 = sbr.rel (0) target = $region21
    $region20: #{tpu_custom_call.1} parent=1 // pred_region
      _
    $region21: #{tpu_custom_call.1} parent=1 // pred_fallthru
      _
    // Predicated region
    $region22: #{tpu_custom_call.1} parent=1 // pred_check
      _
    $region23: #{tpu_custom_call.1} parent=1 // pred_check_branch
      %62 = sbr.rel (0) target = $region25
    $region24: #{tpu_custom_call.1} parent=1 // pred_region
      %s64 = ssub.s32 4096, 4096
      %65 = vsyncadd [#allocation10], %s64
      %s66 = sshll.u32 [#allocation9], 4
      %s67 = int_to_ptr.vmem [resolvable:$true] %s66
      %72 = dma.hbm_to_vmem [thread:$0]  %s5, 4096, %s67, [#allocation10], 256, 256, 16
    $region25: #{tpu_custom_call.1} parent=1 // pred_fallthru
      _
    // Predicated region
    $region26: #{tpu_custom_call.1} parent=1 // pred_check
      _
    $region27: #{tpu_custom_call.1} parent=1 // pred_check_branch
      %74 = sbr.rel (0) target = $region29
    $region28: #{tpu_custom_call.1} parent=1 // pred_region
      _
    $region29: #{tpu_custom_call.1} parent=1 // pred_fallthru
      _
    // Predicated region
    $region30: #{tpu_custom_call.1} parent=1 // pred_check
      _
    $region31: #{tpu_custom_call.1} parent=1 // pred_check_branch
      %76 = sbr.rel (0) target = $region33
    $region32: #{tpu_custom_call.1} parent=1 // pred_region
      %s78 = ssub.s32 3072, 3072
      %79 = vsyncadd [#allocation10], %s78
      %s80 = sshll.u32 [#allocation11], 4
      %s81 = int_to_ptr.vmem [resolvable:$true] %s80
      %86 = dma.hbm_to_vmem [thread:$0]  %s7, 3072, %s81, [#allocation10], 64, 64, 4
    $region33: #{tpu_custom_call.1} parent=1 // pred_fallthru
      _
    // Predicated region
    $region34: #{tpu_custom_call.1} parent=1 // pred_check
      _
    $region35: #{tpu_custom_call.1} parent=1 // pred_check_branch
      %88 = sbr.rel (0) target = $region37
    $region36: #{tpu_custom_call.1} parent=1 // pred_region
      _
    $region37: #{tpu_custom_call.1} parent=1 // pred_fallthru
      _
    // Predicated region
    $region38: #{tpu_custom_call.1} parent=1 // pred_check
      _
    $region39: #{tpu_custom_call.1} parent=1 // pred_check_branch
      %90 = sbr.rel (0) target = $region41
    $region40: #{tpu_custom_call.1} parent=1 // pred_region
      %s92 = ssub.s32 1024, 1024
      %93 = vsyncadd [#allocation13], %s92
      %s94 = sshll.u32 [#allocation12], 4
      %s95 = int_to_ptr.vmem [resolvable:$true] %s94
      %100 = dma.hbm_to_vmem [thread:$0]  %s9, 1024, %s95, [#allocation13], 64, 64, 4
    $region41: #{tpu_custom_call.1} parent=1 // pred_fallthru
      _
    // Predicated region
    $region42: #{tpu_custom_call.1} parent=1 // pred_check
      _
    $region43: #{tpu_custom_call.1} parent=1 // pred_check_branch
      %102 = sbr.rel (0) target = $region45
    $region44: #{tpu_custom_call.1} parent=1 // pred_region
      _
    $region45: #{tpu_custom_call.1} parent=1 // pred_fallthru
      _
    // Predicated region
    $region46: #{tpu_custom_call.1} parent=1 // pred_check
      _
    $region47: #{tpu_custom_call.1} parent=1 // pred_check_branch
      %104 = sbr.rel (0) target = $region49
    $region48: #{tpu_custom_call.1} parent=1 // pred_region
      %105 = dma.done [#allocation4], 512
    $region49: #{tpu_custom_call.1} parent=1 // pred_fallthru
      _
    // Predicated region
    $region50: #{tpu_custom_call.1} parent=1 // pred_check
      _
    $region51: #{tpu_custom_call.1} parent=1 // pred_check_branch
      %107 = sbr.rel (0) target = $region53
    $region52: #{tpu_custom_call.1} parent=1 // pred_region
      %108 = dma.done [#allocation7], 2048
    $region53: #{tpu_custom_call.1} parent=1 // pred_fallthru
      _
    // Predicated region
    $region54: #{tpu_custom_call.1} parent=1 // pred_check
      _
    $region55: #{tpu_custom_call.1} parent=1 // pred_check_branch
      %110 = sbr.rel (0) target = $region57
    $region56: #{tpu_custom_call.1} parent=1 // pred_region
      %111 = dma.done [#allocation7], 3072
    $region57: #{tpu_custom_call.1} parent=1 // pred_fallthru
      _
    // Predicated region
    $region58: #{tpu_custom_call.1} parent=1 // pred_check
      _
    $region59: #{tpu_custom_call.1} parent=1 // pred_check_branch
      %113 = sbr.rel (0) target = $region61
    $region60: #{tpu_custom_call.1} parent=1 // pred_region
      %114 = dma.done [#allocation10], 4096
    $region61: #{tpu_custom_call.1} parent=1 // pred_fallthru
      _
    // Predicated region
    $region62: #{tpu_custom_call.1} parent=1 // pred_check
      _
    $region63: #{tpu_custom_call.1} parent=1 // pred_check_branch
      %116 = sbr.rel (0) target = $region65
    $region64: #{tpu_custom_call.1} parent=1 // pred_region
      %117 = dma.done [#allocation10], 3072
    $region65: #{tpu_custom_call.1} parent=1 // pred_fallthru
      _
    // Predicated region
    $region66: #{tpu_custom_call.1} parent=1 // pred_check
      _
    $region67: #{tpu_custom_call.1} parent=1 // pred_check_branch
      %119 = sbr.rel (0) target = $region69
    $region68: #{tpu_custom_call.1} parent=1 // pred_region
      %120 = dma.done [#allocation13], 1024
    $region69: #{tpu_custom_call.1} parent=1 // pred_fallthru
      _
    %v122 = vld [vmem:[#allocation3] sm:$0xf]
    %v123 = vld [vmem:[#allocation3 + $0x4] sm:$0xf]
    %v124 = vld [vmem:[#allocation3 + $0x8] sm:$0xf]
    %v125 = vld [vmem:[#allocation3 + $0xc] sm:$0xf]
    %v126 = vld [vmem:[#allocation3 + $0x10] sm:$0xf]
    %v127 = vld [vmem:[#allocation3 + $0x14] sm:$0xf]
    %v128 = vld [vmem:[#allocation3 + $0x18] sm:$0xf]
    %v129 = vld [vmem:[#allocation3 + $0x1c] sm:$0xf]
    %v130 = vld [vmem:[#allocation6] sm:$0xff]
    %v131 = vld [vmem:[#allocation6 + $0x8] sm:$0xff]
    %v132 = vld [vmem:[#allocation6 + $0x10] sm:$0xff]
    %v133 = vld [vmem:[#allocation6 + $0x18] sm:$0xff]
    %v134 = vld [vmem:[#allocation6 + $0x20] sm:$0xff]
    %v135 = vld [vmem:[#allocation6 + $0x28] sm:$0xff]
    %v136 = vld [vmem:[#allocation6 + $0x30] sm:$0xff]
    %v137 = vld [vmem:[#allocation6 + $0x38] sm:$0xff]
    %v138 = vld [vmem:[#allocation6 + $0x40] sm:$0xff]
    %v139 = vld [vmem:[#allocation6 + $0x48] sm:$0xff]
    %v140 = vld [vmem:[#allocation6 + $0x50] sm:$0xff]
    %v141 = vld [vmem:[#allocation6 + $0x58] sm:$0xff]
    %v142 = vld [vmem:[#allocation6 + $0x60] sm:$0xff]
    %v143 = vld [vmem:[#allocation6 + $0x68] sm:$0xff]
    %v144 = vld [vmem:[#allocation6 + $0x70] sm:$0xff]
    %v145 = vld [vmem:[#allocation6 + $0x78] sm:$0xff]
    %v154 = vunpack.c.l.b16 %v122
    %v155 = vunpack.c.l.b16 %v123
    %v156 = vunpack.c.l.b16 %v124
    %v157 = vunpack.c.l.b16 %v125
    %v158 = vunpack.c.l.b16 %v126
    %v159 = vunpack.c.l.b16 %v127
    %v160 = vunpack.c.l.b16 %v128
    %v161 = vunpack.c.l.b16 %v129
    %v162 = vpack.c.b16 %v155, %v154
    %v163 = vpack.c.b16 %v157, %v156
    %v164 = vpack.c.b16 %v159, %v158
    %v165 = vpack.c.b16 %v161, %v160
    %v186 = vunpack.c.l.b16 %v130
    %v187 = vunpack.c.h.b16 %v130
    %v188 = vunpack.c.l.b16 %v131
    %v189 = vunpack.c.h.b16 %v131
    %v190 = vunpack.c.l.b16 %v132
    %v191 = vunpack.c.h.b16 %v132
    %v192 = vunpack.c.l.b16 %v133
    %v193 = vunpack.c.h.b16 %v133
    %v194 = vunpack.c.l.b16 %v134
    %v195 = vunpack.c.h.b16 %v134
    %v196 = vunpack.c.l.b16 %v135
    %v197 = vunpack.c.h.b16 %v135
    %v198 = vunpack.c.l.b16 %v136
    %v199 = vunpack.c.h.b16 %v136
    %v200 = vunpack.c.l.b16 %v137
    %v201 = vunpack.c.h.b16 %v137
    %v202 = vunpack.c.l.b16 %v138
    %v203 = vunpack.c.h.b16 %v138
    %v204 = vunpack.c.l.b16 %v139
    %v205 = vunpack.c.h.b16 %v139
    %v206 = vunpack.c.l.b16 %v140
    %v207 = vunpack.c.h.b16 %v140
    %v208 = vunpack.c.l.b16 %v141
    %v209 = vunpack.c.h.b16 %v141
    %v210 = vunpack.c.l.b16 %v142
    %v211 = vunpack.c.h.b16 %v142
    %v212 = vunpack.c.l.b16 %v143
    %v213 = vunpack.c.h.b16 %v143
    %v214 = vunpack.c.l.b16 %v144
    %v215 = vunpack.c.h.b16 %v144
    %v216 = vunpack.c.l.b16 %v145
    %v217 = vunpack.c.h.b16 %v145
    %v218 = vpack.c.b16 %v188, %v186
    %v219 = vpack.c.b16 %v189, %v187
    %v220 = vpack.c.b16 %v192, %v190
    %v221 = vpack.c.b16 %v193, %v191
    %v222 = vpack.c.b16 %v196, %v194
    %v223 = vpack.c.b16 %v197, %v195
    %v224 = vpack.c.b16 %v200, %v198
    %v225 = vpack.c.b16 %v201, %v199
    %v226 = vpack.c.b16 %v204, %v202
    %v227 = vpack.c.b16 %v205, %v203
    %v228 = vpack.c.b16 %v208, %v206
    %v229 = vpack.c.b16 %v209, %v207
    %v230 = vpack.c.b16 %v212, %v210
    %v231 = vpack.c.b16 %v213, %v211
    %v232 = vpack.c.b16 %v216, %v214
    %v233 = vpack.c.b16 %v217, %v215
    %250 = vmatprep.subr.bf16.mxu0 %v219
    %251 = vmatpush1.bf16.msra.mxu0 %v218
    %252 = vmatprep.subr.bf16.mxu0 %v221
    %253 = vmatpush1.bf16.msra.mxu0 %v220
    %254 = vmatprep.subr.bf16.mxu0 %v223
    %255 = vmatpush1.bf16.msra.mxu0 %v222
    %256 = vmatprep.subr.bf16.mxu0 %v225
    %257 = vmatpush1.bf16.msra.mxu0 %v224
    %258 = vmatprep.subr.bf16.mxu0 %v227
    %259 = vmatpush1.bf16.msra.mxu0 %v226
    %260 = vmatprep.subr.bf16.mxu0 %v229
    %261 = vmatpush1.bf16.msra.mxu0 %v228
    %262 = vmatprep.subr.bf16.mxu0 %v231
    %263 = vmatpush1.bf16.msra.mxu0 %v230
    %264 = vmatprep.subr.bf16.mxu0 %v233
    %265 = vmatpush1.bf16.msra.mxu0 %v232
    %266 = vmatprep.subr.bf16.mxu0 0
    %267 = vmatpush1.bf16.msra.mxu0 0
    %268 = vmatprep.subr.bf16.mxu0 0
    %269 = vmatpush1.bf16.msra.mxu0 0
    %270 = vmatprep.subr.bf16.mxu0 0
    %271 = vmatpush1.bf16.msra.mxu0 0
    %272 = vmatprep.subr.bf16.mxu0 0
    %273 = vmatpush1.bf16.msra.mxu0 0
    %274 = vmatprep.subr.bf16.mxu0 0
    %275 = vmatpush1.bf16.msra.mxu0 0
    %276 = vmatprep.subr.bf16.mxu0 0
    %277 = vmatpush1.bf16.msra.mxu0 0
    %278 = vmatprep.subr.bf16.mxu0 0
    %279 = vmatpush1.bf16.msra.mxu0 0
    %280 = vmatprep.subr.bf16.mxu0 0
    %281 = vmatpush1.bf16.msra.mxu0 0
    %282 = vmatprep.mubr.bf16.mxu0 0
    %283 = vmatmul.mubr.bf16.gmra.mrb[0].mxu0 %v162
    %v284 = vpop.f32.mrb[0].mxu0
    %v285 = vadd.f32 0.0, %v284
    %v286 = vpop.f32.mrb[0].mxu0
    %v287 = vadd.f32 0.0, %v286
    %v288 = vpop.f32.mrb[0].mxu0
    %v289 = vadd.f32 0.0, %v288
    %v290 = vpop.f32.mrb[0].mxu0
    %v291 = vadd.f32 0.0, %v290
    %292 = vmatprep.mubr.bf16.mxu0 0
    %293 = vmatmul.mubr.bf16.gmra.mrb[0].mxu0 %v163
    %v294 = vpop.f32.mrb[0].mxu0
    %v295 = vadd.f32 0.0, %v294
    %v296 = vpop.f32.mrb[0].mxu0
    %v297 = vadd.f32 0.0, %v296
    %v298 = vpop.f32.mrb[0].mxu0
    %v299 = vadd.f32 0.0, %v298
    %v300 = vpop.f32.mrb[0].mxu0
    %v301 = vadd.f32 0.0, %v300
    %302 = vmatprep.mubr.bf16.mxu0 0
    %303 = vmatmul.mubr.bf16.gmra.mrb[0].mxu0 %v164
    %v304 = vpop.f32.mrb[0].mxu0
    %v305 = vadd.f32 0.0, %v304
    %v306 = vpop.f32.mrb[0].mxu0
    %v307 = vadd.f32 0.0, %v306
    %v308 = vpop.f32.mrb[0].mxu0
    %v309 = vadd.f32 0.0, %v308
    %v310 = vpop.f32.mrb[0].mxu0
    %v311 = vadd.f32 0.0, %v310
    %312 = vmatprep.mubr.bf16.mxu0 0
    %313 = vmatmul.mubr.bf16.gmra.mrb[0].mxu0 %v165
    %v314 = vpop.f32.mrb[0].mxu0
    %v315 = vadd.f32 0.0, %v314
    %v316 = vpop.f32.mrb[0].mxu0
    %v317 = vadd.f32 0.0, %v316
    %v318 = vpop.f32.mrb[0].mxu0
    %v319 = vadd.f32 0.0, %v318
    %v320 = vpop.f32.mrb[0].mxu0
    %v321 = vadd.f32 0.0, %v320
    %322 = vdwg.mxu0
    %v323 = vadd.f32 %v285, 0.0
    %v324 = vadd.f32 %v289, 0.0
    %v325 = vadd.f32 %v295, 0.0
    %v326 = vadd.f32 %v299, 0.0
    %v327 = vadd.f32 %v305, 0.0
    %v328 = vadd.f32 %v309, 0.0
    %v329 = vadd.f32 %v315, 0.0
    %v330 = vadd.f32 %v319, 0.0
    %v339 = vrot.slane %v287, 1
    %v340 = vrot.slane %v291, 1
    %v341 = vrot.slane %v297, 1
    %v342 = vrot.slane %v301, 1
    %v343 = vrot.slane %v307, 1
    %v344 = vrot.slane %v311, 1
    %v345 = vrot.slane %v317, 1
    %v346 = vrot.slane %v321, 1
    %v355 = vadd.f32 %v323, %v339
    %v356 = vadd.f32 %v324, %v340
    %v357 = vadd.f32 %v325, %v341
    %v358 = vadd.f32 %v326, %v342
    %v359 = vadd.f32 %v327, %v343
    %v360 = vadd.f32 %v328, %v344
    %v361 = vadd.f32 %v329, %v345
    %v362 = vadd.f32 %v330, %v346
    %vm363 = vcmask 1046528
    %v364 = vsel %vm363, %v355, -inf
    %v365 = vrot.slane %v364, 4
    %v366 = vmax.f32 %v364, %v365
    %v367 = vrot.slane %v366, 2
    %v368 = vmax.f32 %v366, %v367
    %v369 = vrot.slane %v368, 1
    %v370 = vmax.f32 %v368, %v369
    %v371 = vsel %vm363, %v356, -inf
    %v372 = vrot.slane %v371, 4
    %v373 = vmax.f32 %v371, %v372
    %v374 = vrot.slane %v373, 2
    %v375 = vmax.f32 %v373, %v374
    %v376 = vrot.slane %v375, 1
    %v377 = vmax.f32 %v375, %v376
    %v378 = vsel %vm363, %v357, -inf
    %v379 = vrot.slane %v378, 4
    %v380 = vmax.f32 %v378, %v379
    %v381 = vrot.slane %v380, 2
    %v382 = vmax.f32 %v380, %v381
    %v383 = vrot.slane %v382, 1
    %v384 = vmax.f32 %v382, %v383
    %v385 = vsel %vm363, %v358, -inf
    %v386 = vrot.slane %v385, 4
    %v387 = vmax.f32 %v385, %v386
    %v388 = vrot.slane %v387, 2
    %v389 = vmax.f32 %v387, %v388
    %v390 = vrot.slane %v389, 1
    %v391 = vmax.f32 %v389, %v390
    %v392 = vsel %vm363, %v359, -inf
    %v393 = vrot.slane %v392, 4
    %v394 = vmax.f32 %v392, %v393
    %v395 = vrot.slane %v394, 2
    %v396 = vmax.f32 %v394, %v395
    %v397 = vrot.slane %v396, 1
    %v398 = vmax.f32 %v396, %v397
    %v399 = vsel %vm363, %v360, -inf
    %v400 = vrot.slane %v399, 4
    %v401 = vmax.f32 %v399, %v400
    %v402 = vrot.slane %v401, 2
    %v403 = vmax.f32 %v401, %v402
    %v404 = vrot.slane %v403, 1
    %v405 = vmax.f32 %v403, %v404
    %v406 = vsel %vm363, %v361, -inf
    %v407 = vrot.slane %v406, 4
    %v408 = vmax.f32 %v406, %v407
    %v409 = vrot.slane %v408, 2
    %v410 = vmax.f32 %v408, %v409
    %v411 = vrot.slane %v410, 1
    %v412 = vmax.f32 %v410, %v411
    %v413 = vsel %vm363, %v362, -inf
    %v414 = vrot.slane %v413, 4
    %v415 = vmax.f32 %v413, %v414
    %v416 = vrot.slane %v415, 2
    %v417 = vmax.f32 %v415, %v416
    %v418 = vrot.slane %v417, 1
    %v419 = vmax.f32 %v417, %v418
    %v420 = vld [vmem:[%s2] sm:$0x1]
    %v422 = vlaneseq
    %v423 = vshrl.u32 %v422, 7
    %v424 = vsub.s32 0, %v423
    %v425 = vrot.slane %v420, %v424
    %v427 = vadd.f32 %v370, %v425
    %v428 = vadd.f32 %v377, %v425
    %v429 = vadd.f32 %v384, %v425
    %v430 = vadd.f32 %v391, %v425
    %v431 = vadd.f32 %v398, %v425
    %v432 = vadd.f32 %v405, %v425
    %v433 = vadd.f32 %v412, %v425
    %v434 = vadd.f32 %v419, %v425
    %v435 = vmax.f32 %v427, 0.0
    %v436 = vmax.f32 %v428, 0.0
    %v437 = vmax.f32 %v429, 0.0
    %v438 = vmax.f32 %v430, 0.0
    %v439 = vmax.f32 %v431, 0.0
    %v440 = vmax.f32 %v432, 0.0
    %v441 = vmax.f32 %v433, 0.0
    %v442 = vmax.f32 %v434, 0.0
    %v443 = vpack.c.bf16 %v435, %v435
    %v444 = vpack.c.bf16 %v436, %v436
    %v445 = vpack.c.bf16 %v437, %v437
    %v446 = vpack.c.bf16 %v438, %v438
    %v447 = vpack.c.bf16 %v439, %v439
    %v448 = vpack.c.bf16 %v440, %v440
    %v449 = vpack.c.bf16 %v441, %v441
    %v450 = vpack.c.bf16 %v442, %v442
    %v459 = vunpack.c.l.b16 %v443
    %v460 = vunpack.c.l.b16 %v444
    %v461 = vunpack.c.l.b16 %v445
    %v462 = vunpack.c.l.b16 %v446
    %v463 = vunpack.c.l.b16 %v447
    %v464 = vunpack.c.l.b16 %v448
    %v465 = vunpack.c.l.b16 %v449
    %v466 = vunpack.c.l.b16 %v450
    %v467 = vpack.c.b16 %v459, %v459
    %v468 = vpack.c.b16 %v460, %v460
    %v469 = vpack.c.b16 %v461, %v461
    %v470 = vpack.c.b16 %v462, %v462
    %v471 = vpack.c.b16 %v463, %v463
    %v472 = vpack.c.b16 %v464, %v464
    %v473 = vpack.c.b16 %v465, %v465
    %v474 = vpack.c.b16 %v466, %v466
    %v475 = vunpack.c.l.b16 %v467
    %v476 = vunpack.c.l.b16 %v468
    %v477 = vunpack.c.l.b16 %v469
    %v478 = vunpack.c.l.b16 %v470
    %v479 = vunpack.c.l.b16 %v471
    %v480 = vunpack.c.l.b16 %v472
    %v481 = vunpack.c.l.b16 %v473
    %v482 = vunpack.c.l.b16 %v474
    %v483 = vrot.slane %v476, 7
    %vm484 = vcmask 1041409
    %v485 = vsel %vm484, %v483, %v475
    %v486 = vrot.slane %v477, 6
    %vm487 = vcmask 1042434
    %v488 = vsel %vm487, %v486, %v485
    %v489 = vrot.slane %v478, 5
    %vm490 = vcmask 1043459
    %v491 = vsel %vm490, %v489, %v488
    %v492 = vrot.slane %v479, 4
    %vm493 = vcmask 1044484
    %v494 = vsel %vm493, %v492, %v491
    %v495 = vrot.slane %v480, 3
    %vm496 = vcmask 1045509
    %v497 = vsel %vm496, %v495, %v494
    %v498 = vrot.slane %v481, 2
    %vm499 = vcmask 1046534
    %v500 = vsel %vm499, %v498, %v497
    %v501 = vrot.slane %v482, 1
    %vm502 = vcmask 1047559
    %v503 = vsel %vm502, %v501, %v500
    %v504 = vpack.c.b16 %v503, %v503
    %506 = vst [vmem:[#allocation2] sm:$0xf] %v504
    %v507 = vld [vmem:[#allocation8] sm:$0xff]
    %v508 = vld [vmem:[#allocation8 + $0x8] sm:$0xf]
    %v509 = vld [vmem:[#allocation8 + $0xc] sm:$0xff]
    %v510 = vld [vmem:[#allocation8 + $0x14] sm:$0xf]
    %v511 = vld [vmem:[#allocation8 + $0x18] sm:$0xff]
    %v512 = vld [vmem:[#allocation8 + $0x20] sm:$0xf]
    %v513 = vld [vmem:[#allocation8 + $0x24] sm:$0xff]
    %v514 = vld [vmem:[#allocation8 + $0x2c] sm:$0xf]
    %v515 = vld [vmem:[#allocation8 + $0x30] sm:$0xff]
    %v516 = vld [vmem:[#allocation8 + $0x38] sm:$0xf]
    %v517 = vld [vmem:[#allocation8 + $0x3c] sm:$0xff]
    %v518 = vld [vmem:[#allocation8 + $0x44] sm:$0xf]
    %v519 = vld [vmem:[#allocation8 + $0x48] sm:$0xff]
    %v520 = vld [vmem:[#allocation8 + $0x50] sm:$0xf]
    %v521 = vld [vmem:[#allocation8 + $0x54] sm:$0xff]
    %v522 = vld [vmem:[#allocation8 + $0x5c] sm:$0xf]
    %v523 = vld [vmem:[#allocation8 + $0x60] sm:$0xff]
    %v524 = vld [vmem:[#allocation8 + $0x68] sm:$0xf]
    %v525 = vld [vmem:[#allocation8 + $0x6c] sm:$0xff]
    %v526 = vld [vmem:[#allocation8 + $0x74] sm:$0xf]
    %v527 = vld [vmem:[#allocation8 + $0x78] sm:$0xff]
    %v528 = vld [vmem:[#allocation8 + $0x80] sm:$0xf]
    %v529 = vld [vmem:[#allocation8 + $0x84] sm:$0xff]
    %v530 = vld [vmem:[#allocation8 + $0x8c] sm:$0xf]
    %v531 = vld [vmem:[#allocation8 + $0x90] sm:$0xff]
    %v532 = vld [vmem:[#allocation8 + $0x98] sm:$0xf]
    %v533 = vld [vmem:[#allocation8 + $0x9c] sm:$0xff]
    %v534 = vld [vmem:[#allocation8 + $0xa4] sm:$0xf]
    %v535 = vld [vmem:[#allocation8 + $0xa8] sm:$0xff]
    %v536 = vld [vmem:[#allocation8 + $0xb0] sm:$0xf]
    %v537 = vld [vmem:[#allocation8 + $0xb4] sm:$0xff]
    %v538 = vld [vmem:[#allocation8 + $0xbc] sm:$0xf]
    %v571 = vunpack.c.l.b16 %v507
    %v572 = vunpack.c.h.b16 %v507
    %v573 = vunpack.c.l.b16 %v508
    %v574 = vunpack.c.l.b16 %v509
    %v575 = vunpack.c.h.b16 %v509
    %v576 = vunpack.c.l.b16 %v510
    %v577 = vunpack.c.l.b16 %v511
    %v578 = vunpack.c.h.b16 %v511
    %v579 = vunpack.c.l.b16 %v512
    %v580 = vunpack.c.l.b16 %v513
    %v581 = vunpack.c.h.b16 %v513
    %v582 = vunpack.c.l.b16 %v514
    %v583 = vunpack.c.l.b16 %v515
    %v584 = vunpack.c.h.b16 %v515
    %v585 = vunpack.c.l.b16 %v516
    %v586 = vunpack.c.l.b16 %v517
    %v587 = vunpack.c.h.b16 %v517
    %v588 = vunpack.c.l.b16 %v518
    %v589 = vunpack.c.l.b16 %v519
    %v590 = vunpack.c.h.b16 %v519
    %v591 = vunpack.c.l.b16 %v520
    %v592 = vunpack.c.l.b16 %v521
    %v593 = vunpack.c.h.b16 %v521
    %v594 = vunpack.c.l.b16 %v522
    %v595 = vunpack.c.l.b16 %v523
    %v596 = vunpack.c.h.b16 %v523
    %v597 = vunpack.c.l.b16 %v524
    %v598 = vunpack.c.l.b16 %v525
    %v599 = vunpack.c.h.b16 %v525
    %v600 = vunpack.c.l.b16 %v526
    %v601 = vunpack.c.l.b16 %v527
    %v602 = vunpack.c.h.b16 %v527
    %v603 = vunpack.c.l.b16 %v528
    %v604 = vunpack.c.l.b16 %v529
    %v605 = vunpack.c.h.b16 %v529
    %v606 = vunpack.c.l.b16 %v530
    %v607 = vunpack.c.l.b16 %v531
    %v608 = vunpack.c.h.b16 %v531
    %v609 = vunpack.c.l.b16 %v532
    %v610 = vunpack.c.l.b16 %v533
    %v611 = vunpack.c.h.b16 %v533
    %v612 = vunpack.c.l.b16 %v534
    %v613 = vunpack.c.l.b16 %v535
    %v614 = vunpack.c.h.b16 %v535
    %v615 = vunpack.c.l.b16 %v536
    %v616 = vunpack.c.l.b16 %v537
    %v617 = vunpack.c.h.b16 %v537
    %v618 = vunpack.c.l.b16 %v538
    %v619 = vpack.c.b16 %v574, %v571
    %v620 = vpack.c.b16 %v575, %v572
    %v621 = vpack.c.b16 %v576, %v573
    %v622 = vpack.c.b16 %v580, %v577
    %v623 = vpack.c.b16 %v581, %v578
    %v624 = vpack.c.b16 %v582, %v579
    %v625 = vpack.c.b16 %v586, %v583
    %v626 = vpack.c.b16 %v587, %v584
    %v627 = vpack.c.b16 %v588, %v585
    %v628 = vpack.c.b16 %v592, %v589
    %v629 = vpack.c.b16 %v593, %v590
    %v630 = vpack.c.b16 %v594, %v591
    %v631 = vpack.c.b16 %v598, %v595
    %v632 = vpack.c.b16 %v599, %v596
    %v633 = vpack.c.b16 %v600, %v597
    %v634 = vpack.c.b16 %v604, %v601
    %v635 = vpack.c.b16 %v605, %v602
    %v636 = vpack.c.b16 %v606, %v603
    %v637 = vpack.c.b16 %v610, %v607
    %v638 = vpack.c.b16 %v611, %v608
    %v639 = vpack.c.b16 %v612, %v609
    %v640 = vpack.c.b16 %v616, %v613
    %v641 = vpack.c.b16 %v617, %v614
    %v642 = vpack.c.b16 %v618, %v615
    %667 = vmatprep.subr.bf16.mxu0 %v620
    %668 = vmatpush1.bf16.msra.mxu0 %v619
    %669 = vmatprep.subr.bf16.mxu0 %v623
    %670 = vmatpush1.bf16.msra.mxu0 %v622
    %671 = vmatprep.subr.bf16.mxu0 %v626
    %672 = vmatpush1.bf16.msra.mxu0 %v625
    %673 = vmatprep.subr.bf16.mxu0 %v629
    %674 = vmatpush1.bf16.msra.mxu0 %v628
    %675 = vmatprep.subr.bf16.mxu0 %v632
    %676 = vmatpush1.bf16.msra.mxu0 %v631
    %677 = vmatprep.subr.bf16.mxu0 %v635
    %678 = vmatpush1.bf16.msra.mxu0 %v634
    %679 = vmatprep.subr.bf16.mxu0 %v638
    %680 = vmatpush1.bf16.msra.mxu0 %v637
    %681 = vmatprep.subr.bf16.mxu0 %v641
    %682 = vmatpush1.bf16.msra.mxu0 %v640
    %683 = vmatprep.subr.bf16.mxu0 0
    %684 = vmatpush1.bf16.msra.mxu0 0
    %685 = vmatprep.subr.bf16.mxu0 0
    %686 = vmatpush1.bf16.msra.mxu0 0
    %687 = vmatprep.subr.bf16.mxu0 0
    %688 = vmatpush1.bf16.msra.mxu0 0
    %689 = vmatprep.subr.bf16.mxu0 0
    %690 = vmatpush1.bf16.msra.mxu0 0
    %691 = vmatprep.subr.bf16.mxu0 0
    %692 = vmatpush1.bf16.msra.mxu0 0
    %693 = vmatprep.subr.bf16.mxu0 0
    %694 = vmatpush1.bf16.msra.mxu0 0
    %695 = vmatprep.subr.bf16.mxu0 0
    %696 = vmatpush1.bf16.msra.mxu0 0
    %697 = vmatprep.subr.bf16.mxu0 0
    %698 = vmatpush1.bf16.msra.mxu0 0
    %699 = vmatprep.mubr.bf16.mxu0 0
    %700 = vmatmul.mubr.bf16.gmra.mrb[0].mxu0 %v162
    %v701 = vpop.f32.mrb[0].mxu0
    %v702 = vadd.f32 0.0, %v701
    %v703 = vpop.f32.mrb[0].mxu0
    %v704 = vadd.f32 0.0, %v703
    %v705 = vpop.f32.mrb[0].mxu0
    %v706 = vadd.f32 0.0, %v705
    %v707 = vpop.f32.mrb[0].mxu0
    %v708 = vadd.f32 0.0, %v707
    %709 = vmatprep.mubr.bf16.mxu0 0
    %710 = vmatmul.mubr.bf16.gmra.mrb[0].mxu0 %v163
    %v711 = vpop.f32.mrb[0].mxu0
    %v712 = vadd.f32 0.0, %v711
    %v713 = vpop.f32.mrb[0].mxu0
    %v714 = vadd.f32 0.0, %v713
    %v715 = vpop.f32.mrb[0].mxu0
    %v716 = vadd.f32 0.0, %v715
    %v717 = vpop.f32.mrb[0].mxu0
    %v718 = vadd.f32 0.0, %v717
    %719 = vmatprep.mubr.bf16.mxu0 0
    %720 = vmatmul.mubr.bf16.gmra.mrb[0].mxu0 %v164
    %v721 = vpop.f32.mrb[0].mxu0
    %v722 = vadd.f32 0.0, %v721
    %v723 = vpop.f32.mrb[0].mxu0
    %v724 = vadd.f32 0.0, %v723
    %v725 = vpop.f32.mrb[0].mxu0
    %v726 = vadd.f32 0.0, %v725
    %v727 = vpop.f32.mrb[0].mxu0
    %v728 = vadd.f32 0.0, %v727
    %729 = vmatprep.mubr.bf16.mxu0 0
    %730 = vmatmul.mubr.bf16.gmra.mrb[0].mxu0 %v165
    %v731 = vpop.f32.mrb[0].mxu0
    %v732 = vadd.f32 0.0, %v731
    %v733 = vpop.f32.mrb[0].mxu0
    %v734 = vadd.f32 0.0, %v733
    %v735 = vpop.f32.mrb[0].mxu0
    %v736 = vadd.f32 0.0, %v735
    %v737 = vpop.f32.mrb[0].mxu0
    %v738 = vadd.f32 0.0, %v737
    %739 = vdwg.mxu0
    %740 = vmatprep.subr.bf16.mxu0 0
    %741 = vmatpush1.bf16.msra.mxu0 %v621
    %742 = vmatprep.subr.bf16.mxu0 0
    %743 = vmatpush1.bf16.msra.mxu0 %v624
    %744 = vmatprep.subr.bf16.mxu0 0
    %745 = vmatpush1.bf16.msra.mxu0 %v627
    %746 = vmatprep.subr.bf16.mxu0 0
    %747 = vmatpush1.bf16.msra.mxu0 %v630
    %748 = vmatprep.subr.bf16.mxu0 0
    %749 = vmatpush1.bf16.msra.mxu0 %v633
    %750 = vmatprep.subr.bf16.mxu0 0
    %751 = vmatpush1.bf16.msra.mxu0 %v636
    %752 = vmatprep.subr.bf16.mxu0 0
    %753 = vmatpush1.bf16.msra.mxu0 %v639
    %754 = vmatprep.subr.bf16.mxu0 0
    %755 = vmatpush1.bf16.msra.mxu0 %v642
    %756 = vmatprep.subr.bf16.mxu0 0
    %757 = vmatpush1.bf16.msra.mxu0 0
    %758 = vmatprep.subr.bf16.mxu0 0
    %759 = vmatpush1.bf16.msra.mxu0 0
    %760 = vmatprep.subr.bf16.mxu0 0
    %761 = vmatpush1.bf16.msra.mxu0 0
    %762 = vmatprep.subr.bf16.mxu0 0
    %763 = vmatpush1.bf16.msra.mxu0 0
    %764 = vmatprep.subr.bf16.mxu0 0
    %765 = vmatpush1.bf16.msra.mxu0 0
    %766 = vmatprep.subr.bf16.mxu0 0
    %767 = vmatpush1.bf16.msra.mxu0 0
    %768 = vmatprep.subr.bf16.mxu0 0
    %769 = vmatpush1.bf16.msra.mxu0 0
    %770 = vmatprep.subr.bf16.mxu0 0
    %771 = vmatpush1.bf16.msra.mxu0 0
    %772 = vmatprep.mubr.bf16.mxu0 0
    %773 = vmatmul.mubr.bf16.gmra.mrb[0].mxu0 %v162
    %v774 = vpop.f32.mrb[0].mxu0
    %v775 = vadd.f32 0.0, %v774
    %v776 = vpop.f32.mrb[0].mxu0
    %v777 = vpop.f32.mrb[0].mxu0
    %v778 = vadd.f32 0.0, %v777
    %v779 = vpop.f32.mrb[0].mxu0
    %780 = vmatprep.mubr.bf16.mxu0 0
    %781 = vmatmul.mubr.bf16.gmra.mrb[0].mxu0 %v163
    %v782 = vpop.f32.mrb[0].mxu0
    %v783 = vadd.f32 0.0, %v782
    %v784 = vpop.f32.mrb[0].mxu0
    %v785 = vpop.f32.mrb[0].mxu0
    %v786 = vadd.f32 0.0, %v785
    %v787 = vpop.f32.mrb[0].mxu0
    %788 = vmatprep.mubr.bf16.mxu0 0
    %789 = vmatmul.mubr.bf16.gmra.mrb[0].mxu0 %v164
    %v790 = vpop.f32.mrb[0].mxu0
    %v791 = vadd.f32 0.0, %v790
    %v792 = vpop.f32.mrb[0].mxu0
    %v793 = vpop.f32.mrb[0].mxu0
    %v794 = vadd.f32 0.0, %v793
    %v795 = vpop.f32.mrb[0].mxu0
    %796 = vmatprep.mubr.bf16.mxu0 0
    %797 = vmatmul.mubr.bf16.gmra.mrb[0].mxu0 %v165
    %v798 = vpop.f32.mrb[0].mxu0
    %v799 = vadd.f32 0.0, %v798
    %v800 = vpop.f32.mrb[0].mxu0
    %v801 = vpop.f32.mrb[0].mxu0
    %v802 = vadd.f32 0.0, %v801
    %v803 = vpop.f32.mrb[0].mxu0
    %804 = vdwg.mxu0
    %v805 = vadd.f32 %v702, 0.0
    %v806 = vadd.f32 %v706, 0.0
    %v807 = vadd.f32 %v712, 0.0
    %v808 = vadd.f32 %v716, 0.0
    %v809 = vadd.f32 %v722, 0.0
    %v810 = vadd.f32 %v726, 0.0
    %v811 = vadd.f32 %v732, 0.0
    %v812 = vadd.f32 %v736, 0.0
    %v821 = vrot.slane %v704, 1
    %v822 = vrot.slane %v708, 1
    %v823 = vrot.slane %v714, 1
    %v824 = vrot.slane %v718, 1
    %v825 = vrot.slane %v724, 1
    %v826 = vrot.slane %v728, 1
    %v827 = vrot.slane %v734, 1
    %v828 = vrot.slane %v738, 1
    %v837 = vadd.f32 %v805, %v821
    %v838 = vadd.f32 %v806, %v822
    %v839 = vadd.f32 %v807, %v823
    %v840 = vadd.f32 %v808, %v824
    %v841 = vadd.f32 %v809, %v825
    %v842 = vadd.f32 %v810, %v826
    %v843 = vadd.f32 %v811, %v827
    %v844 = vadd.f32 %v812, %v828
    %v853 = vrot.slane %v775, 2
    %v854 = vrot.slane %v778, 2
    %v855 = vrot.slane %v783, 2
    %v856 = vrot.slane %v786, 2
    %v857 = vrot.slane %v791, 2
    %v858 = vrot.slane %v794, 2
    %v859 = vrot.slane %v799, 2
    %v860 = vrot.slane %v802, 2
    %v869 = vadd.f32 %v837, %v853
    %v870 = vadd.f32 %v838, %v854
    %v871 = vadd.f32 %v839, %v855
    %v872 = vadd.f32 %v840, %v856
    %v873 = vadd.f32 %v841, %v857
    %v874 = vadd.f32 %v842, %v858
    %v875 = vadd.f32 %v843, %v859
    %v876 = vadd.f32 %v844, %v860
    %vm877 = vcmask 1045504
    %v878 = vsel %vm877, %v869, -inf
    %v879 = vrot.slane %v878, 4
    %v880 = vmax.f32 %v878, %v879
    %v881 = vrot.slane %v880, 2
    %v882 = vmax.f32 %v880, %v881
    %v883 = vrot.slane %v882, 1
    %v884 = vmax.f32 %v882, %v883
    %v885 = vsel %vm877, %v870, -inf
    %v886 = vrot.slane %v885, 4
    %v887 = vmax.f32 %v885, %v886
    %v888 = vrot.slane %v887, 2
    %v889 = vmax.f32 %v887, %v888
    %v890 = vrot.slane %v889, 1
    %v891 = vmax.f32 %v889, %v890
    %v892 = vsel %vm877, %v871, -inf
    %v893 = vrot.slane %v892, 4
    %v894 = vmax.f32 %v892, %v893
    %v895 = vrot.slane %v894, 2
    %v896 = vmax.f32 %v894, %v895
    %v897 = vrot.slane %v896, 1
    %v898 = vmax.f32 %v896, %v897
    %v899 = vsel %vm877, %v872, -inf
    %v900 = vrot.slane %v899, 4
    %v901 = vmax.f32 %v899, %v900
    %v902 = vrot.slane %v901, 2
    %v903 = vmax.f32 %v901, %v902
    %v904 = vrot.slane %v903, 1
    %v905 = vmax.f32 %v903, %v904
    %v906 = vsel %vm877, %v873, -inf
    %v907 = vrot.slane %v906, 4
    %v908 = vmax.f32 %v906, %v907
    %v909 = vrot.slane %v908, 2
    %v910 = vmax.f32 %v908, %v909
    %v911 = vrot.slane %v910, 1
    %v912 = vmax.f32 %v910, %v911
    %v913 = vsel %vm877, %v874, -inf
    %v914 = vrot.slane %v913, 4
    %v915 = vmax.f32 %v913, %v914
    %v916 = vrot.slane %v915, 2
    %v917 = vmax.f32 %v915, %v916
    %v918 = vrot.slane %v917, 1
    %v919 = vmax.f32 %v917, %v918
    %v920 = vsel %vm877, %v875, -inf
    %v921 = vrot.slane %v920, 4
    %v922 = vmax.f32 %v920, %v921
    %v923 = vrot.slane %v922, 2
    %v924 = vmax.f32 %v922, %v923
    %v925 = vrot.slane %v924, 1
    %v926 = vmax.f32 %v924, %v925
    %v927 = vsel %vm877, %v876, -inf
    %v928 = vrot.slane %v927, 4
    %v929 = vmax.f32 %v927, %v928
    %v930 = vrot.slane %v929, 2
    %v931 = vmax.f32 %v929, %v930
    %v932 = vrot.slane %v931, 1
    %v933 = vmax.f32 %v931, %v932
    %v934 = vld [vmem:[%s4] sm:$0x1]
    %v936 = vlaneseq
    %v937 = vshrl.u32 %v936, 7
    %v938 = vsub.s32 0, %v937
    %v939 = vrot.slane %v934, %v938
    %v941 = vadd.f32 %v884, %v939
    %v942 = vadd.f32 %v891, %v939
    %v943 = vadd.f32 %v898, %v939
    %v944 = vadd.f32 %v905, %v939
    %v945 = vadd.f32 %v912, %v939
    %v946 = vadd.f32 %v919, %v939
    %v947 = vadd.f32 %v926, %v939
    %v948 = vadd.f32 %v933, %v939
    %v949 = vmax.f32 %v941, 0.0
    %v950 = vmax.f32 %v942, 0.0
    %v951 = vmax.f32 %v943, 0.0
    %v952 = vmax.f32 %v944, 0.0
    %v953 = vmax.f32 %v945, 0.0
    %v954 = vmax.f32 %v946, 0.0
    %v955 = vmax.f32 %v947, 0.0
    %v956 = vmax.f32 %v948, 0.0
    %v957 = vpack.c.bf16 %v949, %v949
    %v958 = vpack.c.bf16 %v950, %v950
    %v959 = vpack.c.bf16 %v951, %v951
    %v960 = vpack.c.bf16 %v952, %v952
    %v961 = vpack.c.bf16 %v953, %v953
    %v962 = vpack.c.bf16 %v954, %v954
    %v963 = vpack.c.bf16 %v955, %v955
    %v964 = vpack.c.bf16 %v956, %v956
    %v973 = vunpack.c.l.b16 %v957
    %v974 = vunpack.c.l.b16 %v958
    %v975 = vunpack.c.l.b16 %v959
    %v976 = vunpack.c.l.b16 %v960
    %v977 = vunpack.c.l.b16 %v961
    %v978 = vunpack.c.l.b16 %v962
    %v979 = vunpack.c.l.b16 %v963
    %v980 = vunpack.c.l.b16 %v964
    %v981 = vpack.c.b16 %v973, %v973
    %v982 = vpack.c.b16 %v974, %v974
    %v983 = vpack.c.b16 %v975, %v975
    %v984 = vpack.c.b16 %v976, %v976
    %v985 = vpack.c.b16 %v977, %v977
    %v986 = vpack.c.b16 %v978, %v978
    %v987 = vpack.c.b16 %v979, %v979
    %v988 = vpack.c.b16 %v980, %v980
    %v989 = vunpack.c.l.b16 %v981
    %v990 = vunpack.c.l.b16 %v982
    %v991 = vunpack.c.l.b16 %v983
    %v992 = vunpack.c.l.b16 %v984
    %v993 = vunpack.c.l.b16 %v985
    %v994 = vunpack.c.l.b16 %v986
    %v995 = vunpack.c.l.b16 %v987
    %v996 = vunpack.c.l.b16 %v988
    %v997 = vrot.slane %v990, 7
    %v998 = vsel %vm484, %v997, %v989
    %v999 = vrot.slane %v991, 6
    %v1000 = vsel %vm487, %v999, %v998
    %v1001 = vrot.slane %v992, 5
    %v1002 = vsel %vm490, %v1001, %v1000
    %v1003 = vrot.slane %v993, 4
    %v1004 = vsel %vm493, %v1003, %v1002
    %v1005 = vrot.slane %v994, 3
    %v1006 = vsel %vm496, %v1005, %v1004
    %v1007 = vrot.slane %v995, 2
    %v1008 = vsel %vm499, %v1007, %v1006
    %v1009 = vrot.slane %v996, 1
    %v1010 = vsel %vm502, %v1009, %v1008
    %v1011 = vpack.c.b16 %v1010, %v1010
    %1013 = vst [vmem:[#allocation2 + $0x4] sm:$0xf] %v1011
    %v1014 = vld [vmem:[#allocation9] sm:$0xff]
    %v1015 = vld [vmem:[#allocation9 + $0x8] sm:$0xff]
    %v1016 = vld [vmem:[#allocation9 + $0x10] sm:$0xff]
    %v1017 = vld [vmem:[#allocation9 + $0x18] sm:$0xff]
    %v1018 = vld [vmem:[#allocation9 + $0x20] sm:$0xff]
    %v1019 = vld [vmem:[#allocation9 + $0x28] sm:$0xff]
    %v1020 = vld [vmem:[#allocation9 + $0x30] sm:$0xff]
    %v1021 = vld [vmem:[#allocation9 + $0x38] sm:$0xff]
    %v1022 = vld [vmem:[#allocation9 + $0x40] sm:$0xff]
    %v1023 = vld [vmem:[#allocation9 + $0x48] sm:$0xff]
    %v1024 = vld [vmem:[#allocation9 + $0x50] sm:$0xff]
    %v1025 = vld [vmem:[#allocation9 + $0x58] sm:$0xff]
    %v1026 = vld [vmem:[#allocation9 + $0x60] sm:$0xff]
    %v1027 = vld [vmem:[#allocation9 + $0x68] sm:$0xff]
    %v1028 = vld [vmem:[#allocation9 + $0x70] sm:$0xff]
    %v1029 = vld [vmem:[#allocation9 + $0x78] sm:$0xff]
    %v1030 = vld [vmem:[#allocation9 + $0x80] sm:$0xff]
    %v1031 = vld [vmem:[#allocation9 + $0x88] sm:$0xff]
    %v1032 = vld [vmem:[#allocation9 + $0x90] sm:$0xff]
    %v1033 = vld [vmem:[#allocation9 + $0x98] sm:$0xff]
    %v1034 = vld [vmem:[#allocation9 + $0xa0] sm:$0xff]
    %v1035 = vld [vmem:[#allocation9 + $0xa8] sm:$0xff]
    %v1036 = vld [vmem:[#allocation9 + $0xb0] sm:$0xff]
    %v1037 = vld [vmem:[#allocation9 + $0xb8] sm:$0xff]
    %v1038 = vld [vmem:[#allocation9 + $0xc0] sm:$0xff]
    %v1039 = vld [vmem:[#allocation9 + $0xc8] sm:$0xff]
    %v1040 = vld [vmem:[#allocation9 + $0xd0] sm:$0xff]
    %v1041 = vld [vmem:[#allocation9 + $0xd8] sm:$0xff]
    %v1042 = vld [vmem:[#allocation9 + $0xe0] sm:$0xff]
    %v1043 = vld [vmem:[#allocation9 + $0xe8] sm:$0xff]
    %v1044 = vld [vmem:[#allocation9 + $0xf0] sm:$0xff]
    %v1045 = vld [vmem:[#allocation9 + $0xf8] sm:$0xff]
    %v1078 = vunpack.c.l.b16 %v1014
    %v1079 = vunpack.c.h.b16 %v1014
    %v1080 = vunpack.c.l.b16 %v1015
    %v1081 = vunpack.c.h.b16 %v1015
    %v1082 = vunpack.c.l.b16 %v1016
    %v1083 = vunpack.c.h.b16 %v1016
    %v1084 = vunpack.c.l.b16 %v1017
    %v1085 = vunpack.c.h.b16 %v1017
    %v1086 = vunpack.c.l.b16 %v1018
    %v1087 = vunpack.c.h.b16 %v1018
    %v1088 = vunpack.c.l.b16 %v1019
    %v1089 = vunpack.c.h.b16 %v1019
    %v1090 = vunpack.c.l.b16 %v1020
    %v1091 = vunpack.c.h.b16 %v1020
    %v1092 = vunpack.c.l.b16 %v1021
    %v1093 = vunpack.c.h.b16 %v1021
    %v1094 = vunpack.c.l.b16 %v1022
    %v1095 = vunpack.c.h.b16 %v1022
    %v1096 = vunpack.c.l.b16 %v1023
    %v1097 = vunpack.c.h.b16 %v1023
    %v1098 = vunpack.c.l.b16 %v1024
    %v1099 = vunpack.c.h.b16 %v1024
    %v1100 = vunpack.c.l.b16 %v1025
    %v1101 = vunpack.c.h.b16 %v1025
    %v1102 = vunpack.c.l.b16 %v1026
    %v1103 = vunpack.c.h.b16 %v1026
    %v1104 = vunpack.c.l.b16 %v1027
    %v1105 = vunpack.c.h.b16 %v1027
    %v1106 = vunpack.c.l.b16 %v1028
    %v1107 = vunpack.c.h.b16 %v1028
    %v1108 = vunpack.c.l.b16 %v1029
    %v1109 = vunpack.c.h.b16 %v1029
    %v1110 = vunpack.c.l.b16 %v1030
    %v1111 = vunpack.c.h.b16 %v1030
    %v1112 = vunpack.c.l.b16 %v1031
    %v1113 = vunpack.c.h.b16 %v1031
    %v1114 = vunpack.c.l.b16 %v1032
    %v1115 = vunpack.c.h.b16 %v1032
    %v1116 = vunpack.c.l.b16 %v1033
    %v1117 = vunpack.c.h.b16 %v1033
    %v1118 = vunpack.c.l.b16 %v1034
    %v1119 = vunpack.c.h.b16 %v1034
    %v1120 = vunpack.c.l.b16 %v1035
    %v1121 = vunpack.c.h.b16 %v1035
    %v1122 = vunpack.c.l.b16 %v1036
    %v1123 = vunpack.c.h.b16 %v1036
    %v1124 = vunpack.c.l.b16 %v1037
    %v1125 = vunpack.c.h.b16 %v1037
    %v1126 = vunpack.c.l.b16 %v1038
    %v1127 = vunpack.c.h.b16 %v1038
    %v1128 = vunpack.c.l.b16 %v1039
    %v1129 = vunpack.c.h.b16 %v1039
    %v1130 = vunpack.c.l.b16 %v1040
    %v1131 = vunpack.c.h.b16 %v1040
    %v1132 = vunpack.c.l.b16 %v1041
    %v1133 = vunpack.c.h.b16 %v1041
    %v1134 = vunpack.c.l.b16 %v1042
    %v1135 = vunpack.c.h.b16 %v1042
    %v1136 = vunpack.c.l.b16 %v1043
    %v1137 = vunpack.c.h.b16 %v1043
    %v1138 = vunpack.c.l.b16 %v1044
    %v1139 = vunpack.c.h.b16 %v1044
    %v1140 = vunpack.c.l.b16 %v1045
    %v1141 = vunpack.c.h.b16 %v1045
    %v1142 = vpack.c.b16 %v1082, %v1078
    %v1143 = vpack.c.b16 %v1083, %v1079
    %v1144 = vpack.c.b16 %v1084, %v1080
    %v1145 = vpack.c.b16 %v1085, %v1081
    %v1146 = vpack.c.b16 %v1090, %v1086
    %v1147 = vpack.c.b16 %v1091, %v1087
    %v1148 = vpack.c.b16 %v1092, %v1088
    %v1149 = vpack.c.b16 %v1093, %v1089
    %v1150 = vpack.c.b16 %v1098, %v1094
    %v1151 = vpack.c.b16 %v1099, %v1095
    %v1152 = vpack.c.b16 %v1100, %v1096
    %v1153 = vpack.c.b16 %v1101, %v1097
    %v1154 = vpack.c.b16 %v1106, %v1102
    %v1155 = vpack.c.b16 %v1107, %v1103
    %v1156 = vpack.c.b16 %v1108, %v1104
    %v1157 = vpack.c.b16 %v1109, %v1105
    %v1158 = vpack.c.b16 %v1114, %v1110
    %v1159 = vpack.c.b16 %v1115, %v1111
    %v1160 = vpack.c.b16 %v1116, %v1112
    %v1161 = vpack.c.b16 %v1117, %v1113
    %v1162 = vpack.c.b16 %v1122, %v1118
    %v1163 = vpack.c.b16 %v1123, %v1119
    %v1164 = vpack.c.b16 %v1124, %v1120
    %v1165 = vpack.c.b16 %v1125, %v1121
    %v1166 = vpack.c.b16 %v1130, %v1126
    %v1167 = vpack.c.b16 %v1131, %v1127
    %v1168 = vpack.c.b16 %v1132, %v1128
    %v1169 = vpack.c.b16 %v1133, %v1129
    %v1170 = vpack.c.b16 %v1138, %v1134
    %v1171 = vpack.c.b16 %v1139, %v1135
    %v1172 = vpack.c.b16 %v1140, %v1136
    %v1173 = vpack.c.b16 %v1141, %v1137
    %1206 = vmatprep.subr.bf16.mxu0 %v1143
    %1207 = vmatpush1.bf16.msra.mxu0 %v1142
    %1208 = vmatprep.subr.bf16.mxu0 %v1147
    %1209 = vmatpush1.bf16.msra.mxu0 %v1146
    %1210 = vmatprep.subr.bf16.mxu0 %v1151
    %1211 = vmatpush1.bf16.msra.mxu0 %v1150
    %1212 = vmatprep.subr.bf16.mxu0 %v1155
    %1213 = vmatpush1.bf16.msra.mxu0 %v1154
    %1214 = vmatprep.subr.bf16.mxu0 %v1159
    %1215 = vmatpush1.bf16.msra.mxu0 %v1158
    %1216 = vmatprep.subr.bf16.mxu0 %v1163
    %1217 = vmatpush1.bf16.msra.mxu0 %v1162
    %1218 = vmatprep.subr.bf16.mxu0 %v1167
    %1219 = vmatpush1.bf16.msra.mxu0 %v1166
    %1220 = vmatprep.subr.bf16.mxu0 %v1171
    %1221 = vmatpush1.bf16.msra.mxu0 %v1170
    %1222 = vmatprep.subr.bf16.mxu0 0
    %1223 = vmatpush1.bf16.msra.mxu0 0
    %1224 = vmatprep.subr.bf16.mxu0 0
    %1225 = vmatpush1.bf16.msra.mxu0 0
    %1226 = vmatprep.subr.bf16.mxu0 0
    %1227 = vmatpush1.bf16.msra.mxu0 0
    %1228 = vmatprep.subr.bf16.mxu0 0
    %1229 = vmatpush1.bf16.msra.mxu0 0
    %1230 = vmatprep.subr.bf16.mxu0 0
    %1231 = vmatpush1.bf16.msra.mxu0 0
    %1232 = vmatprep.subr.bf16.mxu0 0
    %1233 = vmatpush1.bf16.msra.mxu0 0
    %1234 = vmatprep.subr.bf16.mxu0 0
    %1235 = vmatpush1.bf16.msra.mxu0 0
    %1236 = vmatprep.subr.bf16.mxu0 0
    %1237 = vmatpush1.bf16.msra.mxu0 0
    %1238 = vmatprep.mubr.bf16.mxu0 0
    %1239 = vmatmul.mubr.bf16.gmra.mrb[0].mxu0 %v162
    %v1240 = vpop.f32.mrb[0].mxu0
    %v1241 = vadd.f32 0.0, %v1240
    %v1242 = vpop.f32.mrb[0].mxu0
    %v1243 = vadd.f32 0.0, %v1242
    %v1244 = vpop.f32.mrb[0].mxu0
    %v1245 = vadd.f32 0.0, %v1244
    %v1246 = vpop.f32.mrb[0].mxu0
    %v1247 = vadd.f32 0.0, %v1246
    %1248 = vmatprep.mubr.bf16.mxu0 0
    %1249 = vmatmul.mubr.bf16.gmra.mrb[0].mxu0 %v163
    %v1250 = vpop.f32.mrb[0].mxu0
    %v1251 = vadd.f32 0.0, %v1250
    %v1252 = vpop.f32.mrb[0].mxu0
    %v1253 = vadd.f32 0.0, %v1252
    %v1254 = vpop.f32.mrb[0].mxu0
    %v1255 = vadd.f32 0.0, %v1254
    %v1256 = vpop.f32.mrb[0].mxu0
    %v1257 = vadd.f32 0.0, %v1256
    %1258 = vmatprep.mubr.bf16.mxu0 0
    %1259 = vmatmul.mubr.bf16.gmra.mrb[0].mxu0 %v164
    %v1260 = vpop.f32.mrb[0].mxu0
    %v1261 = vadd.f32 0.0, %v1260
    %v1262 = vpop.f32.mrb[0].mxu0
    %v1263 = vadd.f32 0.0, %v1262
    %v1264 = vpop.f32.mrb[0].mxu0
    %v1265 = vadd.f32 0.0, %v1264
    %v1266 = vpop.f32.mrb[0].mxu0
    %v1267 = vadd.f32 0.0, %v1266
    %1268 = vmatprep.mubr.bf16.mxu0 0
    %1269 = vmatmul.mubr.bf16.gmra.mrb[0].mxu0 %v165
    %v1270 = vpop.f32.mrb[0].mxu0
    %v1271 = vadd.f32 0.0, %v1270
    %v1272 = vpop.f32.mrb[0].mxu0
    %v1273 = vadd.f32 0.0, %v1272
    %v1274 = vpop.f32.mrb[0].mxu0
    %v1275 = vadd.f32 0.0, %v1274
    %v1276 = vpop.f32.mrb[0].mxu0
    %v1277 = vadd.f32 0.0, %v1276
    %1278 = vdwg.mxu0
    %1279 = vmatprep.subr.bf16.mxu0 %v1145
    %1280 = vmatpush1.bf16.msra.mxu0 %v1144
    %1281 = vmatprep.subr.bf16.mxu0 %v1149
    %1282 = vmatpush1.bf16.msra.mxu0 %v1148
    %1283 = vmatprep.subr.bf16.mxu0 %v1153
    %1284 = vmatpush1.bf16.msra.mxu0 %v1152
    %1285 = vmatprep.subr.bf16.mxu0 %v1157
    %1286 = vmatpush1.bf16.msra.mxu0 %v1156
    %1287 = vmatprep.subr.bf16.mxu0 %v1161
    %1288 = vmatpush1.bf16.msra.mxu0 %v1160
    %1289 = vmatprep.subr.bf16.mxu0 %v1165
    %1290 = vmatpush1.bf16.msra.mxu0 %v1164
    %1291 = vmatprep.subr.bf16.mxu0 %v1169
    %1292 = vmatpush1.bf16.msra.mxu0 %v1168
    %1293 = vmatprep.subr.bf16.mxu0 %v1173
    %1294 = vmatpush1.bf16.msra.mxu0 %v1172
    %1295 = vmatprep.subr.bf16.mxu0 0
    %1296 = vmatpush1.bf16.msra.mxu0 0
    %1297 = vmatprep.subr.bf16.mxu0 0
    %1298 = vmatpush1.bf16.msra.mxu0 0
    %1299 = vmatprep.subr.bf16.mxu0 0
    %1300 = vmatpush1.bf16.msra.mxu0 0
    %1301 = vmatprep.subr.bf16.mxu0 0
    %1302 = vmatpush1.bf16.msra.mxu0 0
    %1303 = vmatprep.subr.bf16.mxu0 0
    %1304 = vmatpush1.bf16.msra.mxu0 0
    %1305 = vmatprep.subr.bf16.mxu0 0
    %1306 = vmatpush1.bf16.msra.mxu0 0
    %1307 = vmatprep.subr.bf16.mxu0 0
    %1308 = vmatpush1.bf16.msra.mxu0 0
    %1309 = vmatprep.subr.bf16.mxu0 0
    %1310 = vmatpush1.bf16.msra.mxu0 0
    %1311 = vmatprep.mubr.bf16.mxu0 0
    %1312 = vmatmul.mubr.bf16.gmra.mrb[0].mxu0 %v162
    %v1313 = vpop.f32.mrb[0].mxu0
    %v1314 = vadd.f32 0.0, %v1313
    %v1315 = vpop.f32.mrb[0].mxu0
    %v1316 = vadd.f32 0.0, %v1315
    %v1317 = vpop.f32.mrb[0].mxu0
    %v1318 = vadd.f32 0.0, %v1317
    %v1319 = vpop.f32.mrb[0].mxu0
    %v1320 = vadd.f32 0.0, %v1319
    %1321 = vmatprep.mubr.bf16.mxu0 0
    %1322 = vmatmul.mubr.bf16.gmra.mrb[0].mxu0 %v163
    %v1323 = vpop.f32.mrb[0].mxu0
    %v1324 = vadd.f32 0.0, %v1323
    %v1325 = vpop.f32.mrb[0].mxu0
    %v1326 = vadd.f32 0.0, %v1325
    %v1327 = vpop.f32.mrb[0].mxu0
    %v1328 = vadd.f32 0.0, %v1327
    %v1329 = vpop.f32.mrb[0].mxu0
    %v1330 = vadd.f32 0.0, %v1329
    %1331 = vmatprep.mubr.bf16.mxu0 0
    %1332 = vmatmul.mubr.bf16.gmra.mrb[0].mxu0 %v164
    %v1333 = vpop.f32.mrb[0].mxu0
    %v1334 = vadd.f32 0.0, %v1333
    %v1335 = vpop.f32.mrb[0].mxu0
    %v1336 = vadd.f32 0.0, %v1335
    %v1337 = vpop.f32.mrb[0].mxu0
    %v1338 = vadd.f32 0.0, %v1337
    %v1339 = vpop.f32.mrb[0].mxu0
    %v1340 = vadd.f32 0.0, %v1339
    %1341 = vmatprep.mubr.bf16.mxu0 0
    %1342 = vmatmul.mubr.bf16.gmra.mrb[0].mxu0 %v165
    %v1343 = vpop.f32.mrb[0].mxu0
    %v1344 = vadd.f32 0.0, %v1343
    %v1345 = vpop.f32.mrb[0].mxu0
    %v1346 = vadd.f32 0.0, %v1345
    %v1347 = vpop.f32.mrb[0].mxu0
    %v1348 = vadd.f32 0.0, %v1347
    %v1349 = vpop.f32.mrb[0].mxu0
    %v1350 = vadd.f32 0.0, %v1349
    %1351 = vdwg.mxu0
    %v1352 = vadd.f32 %v1241, 0.0
    %v1353 = vadd.f32 %v1245, 0.0
    %v1354 = vadd.f32 %v1251, 0.0
    %v1355 = vadd.f32 %v1255, 0.0
    %v1356 = vadd.f32 %v1261, 0.0
    %v1357 = vadd.f32 %v1265, 0.0
    %v1358 = vadd.f32 %v1271, 0.0
    %v1359 = vadd.f32 %v1275, 0.0
    %v1368 = vrot.slane %v1243, 1
    %v1369 = vrot.slane %v1247, 1
    %v1370 = vrot.slane %v1253, 1
    %v1371 = vrot.slane %v1257, 1
    %v1372 = vrot.slane %v1263, 1
    %v1373 = vrot.slane %v1267, 1
    %v1374 = vrot.slane %v1273, 1
    %v1375 = vrot.slane %v1277, 1
    %v1384 = vadd.f32 %v1352, %v1368
    %v1385 = vadd.f32 %v1353, %v1369
    %v1386 = vadd.f32 %v1354, %v1370
    %v1387 = vadd.f32 %v1355, %v1371
    %v1388 = vadd.f32 %v1356, %v1372
    %v1389 = vadd.f32 %v1357, %v1373
    %v1390 = vadd.f32 %v1358, %v1374
    %v1391 = vadd.f32 %v1359, %v1375
    %v1400 = vrot.slane %v1314, 2
    %v1401 = vrot.slane %v1318, 2
    %v1402 = vrot.slane %v1324, 2
    %v1403 = vrot.slane %v1328, 2
    %v1404 = vrot.slane %v1334, 2
    %v1405 = vrot.slane %v1338, 2
    %v1406 = vrot.slane %v1344, 2
    %v1407 = vrot.slane %v1348, 2
    %v1416 = vadd.f32 %v1384, %v1400
    %v1417 = vadd.f32 %v1385, %v1401
    %v1418 = vadd.f32 %v1386, %v1402
    %v1419 = vadd.f32 %v1387, %v1403
    %v1420 = vadd.f32 %v1388, %v1404
    %v1421 = vadd.f32 %v1389, %v1405
    %v1422 = vadd.f32 %v1390, %v1406
    %v1423 = vadd.f32 %v1391, %v1407
    %v1432 = vrot.slane %v1316, 3
    %v1433 = vrot.slane %v1320, 3
    %v1434 = vrot.slane %v1326, 3
    %v1435 = vrot.slane %v1330, 3
    %v1436 = vrot.slane %v1336, 3
    %v1437 = vrot.slane %v1340, 3
    %v1438 = vrot.slane %v1346, 3
    %v1439 = vrot.slane %v1350, 3
    %v1448 = vadd.f32 %v1416, %v1432
    %v1449 = vadd.f32 %v1417, %v1433
    %v1450 = vadd.f32 %v1418, %v1434
    %v1451 = vadd.f32 %v1419, %v1435
    %v1452 = vadd.f32 %v1420, %v1436
    %v1453 = vadd.f32 %v1421, %v1437
    %v1454 = vadd.f32 %v1422, %v1438
    %v1455 = vadd.f32 %v1423, %v1439
    %vm1456 = vcmask 1044480
    %v1457 = vsel %vm1456, %v1448, -inf
    %v1458 = vrot.slane %v1457, 4
    %v1459 = vmax.f32 %v1457, %v1458
    %v1460 = vrot.slane %v1459, 2
    %v1461 = vmax.f32 %v1459, %v1460
    %v1462 = vrot.slane %v1461, 1
    %v1463 = vmax.f32 %v1461, %v1462
    %v1464 = vsel %vm1456, %v1449, -inf
    %v1465 = vrot.slane %v1464, 4
    %v1466 = vmax.f32 %v1464, %v1465
    %v1467 = vrot.slane %v1466, 2
    %v1468 = vmax.f32 %v1466, %v1467
    %v1469 = vrot.slane %v1468, 1
    %v1470 = vmax.f32 %v1468, %v1469
    %v1471 = vsel %vm1456, %v1450, -inf
    %v1472 = vrot.slane %v1471, 4
    %v1473 = vmax.f32 %v1471, %v1472
    %v1474 = vrot.slane %v1473, 2
    %v1475 = vmax.f32 %v1473, %v1474
    %v1476 = vrot.slane %v1475, 1
    %v1477 = vmax.f32 %v1475, %v1476
    %v1478 = vsel %vm1456, %v1451, -inf
    %v1479 = vrot.slane %v1478, 4
    %v1480 = vmax.f32 %v1478, %v1479
    %v1481 = vrot.slane %v1480, 2
    %v1482 = vmax.f32 %v1480, %v1481
    %v1483 = vrot.slane %v1482, 1
    %v1484 = vmax.f32 %v1482, %v1483
    %v1485 = vsel %vm1456, %v1452, -inf
    %v1486 = vrot.slane %v1485, 4
    %v1487 = vmax.f32 %v1485, %v1486
    %v1488 = vrot.slane %v1487, 2
    %v1489 = vmax.f32 %v1487, %v1488
    %v1490 = vrot.slane %v1489, 1
    %v1491 = vmax.f32 %v1489, %v1490
    %v1492 = vsel %vm1456, %v1453, -inf
    %v1493 = vrot.slane %v1492, 4
    %v1494 = vmax.f32 %v1492, %v1493
    %v1495 = vrot.slane %v1494, 2
    %v1496 = vmax.f32 %v1494, %v1495
    %v1497 = vrot.slane %v1496, 1
    %v1498 = vmax.f32 %v1496, %v1497
    %v1499 = vsel %vm1456, %v1454, -inf
    %v1500 = vrot.slane %v1499, 4
    %v1501 = vmax.f32 %v1499, %v1500
    %v1502 = vrot.slane %v1501, 2
    %v1503 = vmax.f32 %v1501, %v1502
    %v1504 = vrot.slane %v1503, 1
    %v1505 = vmax.f32 %v1503, %v1504
    %v1506 = vsel %vm1456, %v1455, -inf
    %v1507 = vrot.slane %v1506, 4
    %v1508 = vmax.f32 %v1506, %v1507
    %v1509 = vrot.slane %v1508, 2
    %v1510 = vmax.f32 %v1508, %v1509
    %v1511 = vrot.slane %v1510, 1
    %v1512 = vmax.f32 %v1510, %v1511
    %v1513 = vld [vmem:[%s6] sm:$0x1]
    %v1515 = vlaneseq
    %v1516 = vshrl.u32 %v1515, 7
    %v1517 = vsub.s32 0, %v1516
    %v1518 = vrot.slane %v1513, %v1517
    %v1520 = vadd.f32 %v1463, %v1518
    %v1521 = vadd.f32 %v1470, %v1518
    %v1522 = vadd.f32 %v1477, %v1518
    %v1523 = vadd.f32 %v1484, %v1518
    %v1524 = vadd.f32 %v1491, %v1518
    %v1525 = vadd.f32 %v1498, %v1518
    %v1526 = vadd.f32 %v1505, %v1518
    %v1527 = vadd.f32 %v1512, %v1518
    %v1528 = vmax.f32 %v1520, 0.0
    %v1529 = vmax.f32 %v1521, 0.0
    %v1530 = vmax.f32 %v1522, 0.0
    %v1531 = vmax.f32 %v1523, 0.0
    %v1532 = vmax.f32 %v1524, 0.0
    %v1533 = vmax.f32 %v1525, 0.0
    %v1534 = vmax.f32 %v1526, 0.0
    %v1535 = vmax.f32 %v1527, 0.0
    %v1536 = vpack.c.bf16 %v1528, %v1528
    %v1537 = vpack.c.bf16 %v1529, %v1529
    %v1538 = vpack.c.bf16 %v1530, %v1530
    %v1539 = vpack.c.bf16 %v1531, %v1531
    %v1540 = vpack.c.bf16 %v1532, %v1532
    %v1541 = vpack.c.bf16 %v1533, %v1533
    %v1542 = vpack.c.bf16 %v1534, %v1534
    %v1543 = vpack.c.bf16 %v1535, %v1535
    %v1552 = vunpack.c.l.b16 %v1536
    %v1553 = vunpack.c.l.b16 %v1537
    %v1554 = vunpack.c.l.b16 %v1538
    %v1555 = vunpack.c.l.b16 %v1539
    %v1556 = vunpack.c.l.b16 %v1540
    %v1557 = vunpack.c.l.b16 %v1541
    %v1558 = vunpack.c.l.b16 %v1542
    %v1559 = vunpack.c.l.b16 %v1543
    %v1560 = vpack.c.b16 %v1552, %v1552
    %v1561 = vpack.c.b16 %v1553, %v1553
    %v1562 = vpack.c.b16 %v1554, %v1554
    %v1563 = vpack.c.b16 %v1555, %v1555
    %v1564 = vpack.c.b16 %v1556, %v1556
    %v1565 = vpack.c.b16 %v1557, %v1557
    %v1566 = vpack.c.b16 %v1558, %v1558
    %v1567 = vpack.c.b16 %v1559, %v1559
    %v1568 = vunpack.c.l.b16 %v1560
    %v1569 = vunpack.c.l.b16 %v1561
    %v1570 = vunpack.c.l.b16 %v1562
    %v1571 = vunpack.c.l.b16 %v1563
    %v1572 = vunpack.c.l.b16 %v1564
    %v1573 = vunpack.c.l.b16 %v1565
    %v1574 = vunpack.c.l.b16 %v1566
    %v1575 = vunpack.c.l.b16 %v1567
    %v1576 = vrot.slane %v1569, 7
    %v1577 = vsel %vm484, %v1576, %v1568
    %v1578 = vrot.slane %v1570, 6
    %v1579 = vsel %vm487, %v1578, %v1577
    %v1580 = vrot.slane %v1571, 5
    %v1581 = vsel %vm490, %v1580, %v1579
    %v1582 = vrot.slane %v1572, 4
    %v1583 = vsel %vm493, %v1582, %v1581
    %v1584 = vrot.slane %v1573, 3
    %v1585 = vsel %vm496, %v1584, %v1583
    %v1586 = vrot.slane %v1574, 2
    %v1587 = vsel %vm499, %v1586, %v1585
    %v1588 = vrot.slane %v1575, 1
    %v1589 = vsel %vm502, %v1588, %v1587
    %v1590 = vpack.c.b16 %v1589, %v1589
    %1592 = vst [vmem:[#allocation2 + $0x8] sm:$0xf] %v1590
    %v1593 = vld [vmem:[#allocation2] sm:$0xff]
    %v1594 = vld [vmem:[#allocation2 + $0x8] sm:$0xf]
    %v1595 = vld [vmem:[#allocation11] sm:$0xf]
    %v1596 = vld [vmem:[#allocation11 + $0x4] sm:$0xf]
    %v1597 = vld [vmem:[#allocation11 + $0x8] sm:$0xf]
    %v1598 = vld [vmem:[#allocation11 + $0xc] sm:$0xf]
    %v1599 = vld [vmem:[#allocation11 + $0x10] sm:$0xf]
    %v1600 = vld [vmem:[#allocation11 + $0x14] sm:$0xf]
    %v1601 = vld [vmem:[#allocation11 + $0x18] sm:$0xf]
    %v1602 = vld [vmem:[#allocation11 + $0x1c] sm:$0xf]
    %v1603 = vld [vmem:[#allocation11 + $0x20] sm:$0xf]
    %v1604 = vld [vmem:[#allocation11 + $0x24] sm:$0xf]
    %v1605 = vld [vmem:[#allocation11 + $0x28] sm:$0xf]
    %v1606 = vld [vmem:[#allocation11 + $0x2c] sm:$0xf]
    %v1607 = vld [vmem:[#allocation11 + $0x30] sm:$0xf]
    %v1608 = vld [vmem:[#allocation11 + $0x34] sm:$0xf]
    %v1609 = vld [vmem:[#allocation11 + $0x38] sm:$0xf]
    %v1610 = vld [vmem:[#allocation11 + $0x3c] sm:$0xf]
    %v1611 = vld [vmem:[#allocation11 + $0x40] sm:$0xf]
    %v1612 = vld [vmem:[#allocation11 + $0x44] sm:$0xf]
    %v1613 = vld [vmem:[#allocation11 + $0x48] sm:$0xf]
    %v1614 = vld [vmem:[#allocation11 + $0x4c] sm:$0xf]
    %v1615 = vld [vmem:[#allocation11 + $0x50] sm:$0xf]
    %v1616 = vld [vmem:[#allocation11 + $0x54] sm:$0xf]
    %v1617 = vld [vmem:[#allocation11 + $0x58] sm:$0xf]
    %v1618 = vld [vmem:[#allocation11 + $0x5c] sm:$0xf]
    %v1619 = vld [vmem:[#allocation11 + $0x60] sm:$0xf]
    %v1620 = vld [vmem:[#allocation11 + $0x64] sm:$0xf]
    %v1621 = vld [vmem:[#allocation11 + $0x68] sm:$0xf]
    %v1622 = vld [vmem:[#allocation11 + $0x6c] sm:$0xf]
    %v1623 = vld [vmem:[#allocation11 + $0x70] sm:$0xf]
    %v1624 = vld [vmem:[#allocation11 + $0x74] sm:$0xf]
    %v1625 = vld [vmem:[#allocation11 + $0x78] sm:$0xf]
    %v1626 = vld [vmem:[#allocation11 + $0x7c] sm:$0xf]
    %v1627 = vld [vmem:[#allocation11 + $0x80] sm:$0xf]
    %v1628 = vld [vmem:[#allocation11 + $0x84] sm:$0xf]
    %v1629 = vld [vmem:[#allocation11 + $0x88] sm:$0xf]
    %v1630 = vld [vmem:[#allocation11 + $0x8c] sm:$0xf]
    %v1631 = vld [vmem:[#allocation11 + $0x90] sm:$0xf]
    %v1632 = vld [vmem:[#allocation11 + $0x94] sm:$0xf]
    %v1633 = vld [vmem:[#allocation11 + $0x98] sm:$0xf]
    %v1634 = vld [vmem:[#allocation11 + $0x9c] sm:$0xf]
    %v1635 = vld [vmem:[#allocation11 + $0xa0] sm:$0xf]
    %v1636 = vld [vmem:[#allocation11 + $0xa4] sm:$0xf]
    %v1637 = vld [vmem:[#allocation11 + $0xa8] sm:$0xf]
    %v1638 = vld [vmem:[#allocation11 + $0xac] sm:$0xf]
    %v1639 = vld [vmem:[#allocation11 + $0xb0] sm:$0xf]
    %v1640 = vld [vmem:[#allocation11 + $0xb4] sm:$0xf]
    %v1641 = vld [vmem:[#allocation11 + $0xb8] sm:$0xf]
    %v1642 = vld [vmem:[#allocation11 + $0xbc] sm:$0xf]
    %v1643 = vld [vmem:[%s8] sm:$0x1]
    %v1645 = vlaneseq
    %v1646 = vshrl.u32 %v1645, 7
    %v1647 = vsub.s32 0, %v1646
    %v1648 = vrot.slane %v1643, %v1647
    %v1652 = vunpack.c.l.b16 %v1593
    %v1653 = vunpack.c.h.b16 %v1593
    %v1654 = vunpack.c.l.b16 %v1594
    %v1655 = vpack.c.b16 %v1652, %v1652
    %v1656 = vpack.c.b16 %v1653, %v1653
    %v1657 = vpack.c.b16 %v1654, %v1654
    %v1709 = vunpack.c.l.b16 %v1595
    %v1710 = vunpack.c.l.b16 %v1596
    %v1711 = vunpack.c.l.b16 %v1597
    %v1712 = vunpack.c.l.b16 %v1598
    %v1713 = vunpack.c.l.b16 %v1599
    %v1714 = vunpack.c.l.b16 %v1600
    %v1715 = vunpack.c.l.b16 %v1601
    %v1716 = vunpack.c.l.b16 %v1602
    %v1717 = vunpack.c.l.b16 %v1603
    %v1718 = vunpack.c.l.b16 %v1604
    %v1719 = vunpack.c.l.b16 %v1605
    %v1720 = vunpack.c.l.b16 %v1606
    %v1721 = vunpack.c.l.b16 %v1607
    %v1722 = vunpack.c.l.b16 %v1608
    %v1723 = vunpack.c.l.b16 %v1609
    %v1724 = vunpack.c.l.b16 %v1610
    %v1725 = vunpack.c.l.b16 %v1611
    %v1726 = vunpack.c.l.b16 %v1612
    %v1727 = vunpack.c.l.b16 %v1613
    %v1728 = vunpack.c.l.b16 %v1614
    %v1729 = vunpack.c.l.b16 %v1615
    %v1730 = vunpack.c.l.b16 %v1616
    %v1731 = vunpack.c.l.b16 %v1617
    %v1732 = vunpack.c.l.b16 %v1618
    %v1733 = vunpack.c.l.b16 %v1619
    %v1734 = vunpack.c.l.b16 %v1620
    %v1735 = vunpack.c.l.b16 %v1621
    %v1736 = vunpack.c.l.b16 %v1622
    %v1737 = vunpack.c.l.b16 %v1623
    %v1738 = vunpack.c.l.b16 %v1624
    %v1739 = vunpack.c.l.b16 %v1625
    %v1740 = vunpack.c.l.b16 %v1626
    %v1741 = vunpack.c.l.b16 %v1627
    %v1742 = vunpack.c.l.b16 %v1628
    %v1743 = vunpack.c.l.b16 %v1629
    %v1744 = vunpack.c.l.b16 %v1630
    %v1745 = vunpack.c.l.b16 %v1631
    %v1746 = vunpack.c.l.b16 %v1632
    %v1747 = vunpack.c.l.b16 %v1633
    %v1748 = vunpack.c.l.b16 %v1634
    %v1749 = vunpack.c.l.b16 %v1635
    %v1750 = vunpack.c.l.b16 %v1636
    %v1751 = vunpack.c.l.b16 %v1637
    %v1752 = vunpack.c.l.b16 %v1638
    %v1753 = vunpack.c.l.b16 %v1639
    %v1754 = vunpack.c.l.b16 %v1640
    %v1755 = vunpack.c.l.b16 %v1641
    %v1756 = vunpack.c.l.b16 %v1642
    %v1757 = vpack.c.b16 %v1710, %v1709
    %v1758 = vpack.c.b16 %v1712, %v1711
    %v1759 = vpack.c.b16 %v1714, %v1713
    %v1760 = vpack.c.b16 %v1716, %v1715
    %v1761 = vpack.c.b16 %v1718, %v1717
    %v1762 = vpack.c.b16 %v1720, %v1719
    %v1763 = vpack.c.b16 %v1722, %v1721
    %v1764 = vpack.c.b16 %v1724, %v1723
    %v1765 = vpack.c.b16 %v1726, %v1725
    %v1766 = vpack.c.b16 %v1728, %v1727
    %v1767 = vpack.c.b16 %v1730, %v1729
    %v1768 = vpack.c.b16 %v1732, %v1731
    %v1769 = vpack.c.b16 %v1734, %v1733
    %v1770 = vpack.c.b16 %v1736, %v1735
    %v1771 = vpack.c.b16 %v1738, %v1737
    %v1772 = vpack.c.b16 %v1740, %v1739
    %v1773 = vpack.c.b16 %v1742, %v1741
    %v1774 = vpack.c.b16 %v1744, %v1743
    %v1775 = vpack.c.b16 %v1746, %v1745
    %v1776 = vpack.c.b16 %v1748, %v1747
    %v1777 = vpack.c.b16 %v1750, %v1749
    %v1778 = vpack.c.b16 %v1752, %v1751
    %v1779 = vpack.c.b16 %v1754, %v1753
    %v1780 = vpack.c.b16 %v1756, %v1755
    %1805 = vmatprep.subr.bf16.mxu0 0
    %1806 = vmatpush1.bf16.msra.mxu0 %v1757
    %1807 = vmatprep.subr.bf16.mxu0 0
    %1808 = vmatpush1.bf16.msra.mxu0 %v1758
    %1809 = vmatprep.subr.bf16.mxu0 0
    %1810 = vmatpush1.bf16.msra.mxu0 %v1759
    %1811 = vmatprep.subr.bf16.mxu0 0
    %1812 = vmatpush1.bf16.msra.mxu0 %v1760
    %1813 = vmatprep.subr.bf16.mxu0 0
    %1814 = vmatpush1.bf16.msra.mxu0 %v1761
    %1815 = vmatprep.subr.bf16.mxu0 0
    %1816 = vmatpush1.bf16.msra.mxu0 %v1762
    %1817 = vmatprep.subr.bf16.mxu0 0
    %1818 = vmatpush1.bf16.msra.mxu0 %v1763
    %1819 = vmatprep.subr.bf16.mxu0 0
    %1820 = vmatpush1.bf16.msra.mxu0 %v1764
    %1821 = vmatprep.subr.bf16.mxu0 0
    %1822 = vmatpush1.bf16.msra.mxu0 %v1765
    %1823 = vmatprep.subr.bf16.mxu0 0
    %1824 = vmatpush1.bf16.msra.mxu0 %v1766
    %1825 = vmatprep.subr.bf16.mxu0 0
    %1826 = vmatpush1.bf16.msra.mxu0 %v1767
    %1827 = vmatprep.subr.bf16.mxu0 0
    %1828 = vmatpush1.bf16.msra.mxu0 %v1768
    %1829 = vmatprep.subr.bf16.mxu0 0
    %1830 = vmatpush1.bf16.msra.mxu0 %v1769
    %1831 = vmatprep.subr.bf16.mxu0 0
    %1832 = vmatpush1.bf16.msra.mxu0 %v1770
    %1833 = vmatprep.subr.bf16.mxu0 0
    %1834 = vmatpush1.bf16.msra.mxu0 %v1771
    %1835 = vmatprep.subr.bf16.mxu0 0
    %1836 = vmatpush1.bf16.msra.mxu0 %v1772
    %1837 = vmatprep.mubr.bf16.mxu0 %v1656
    %1838 = vmatmul.mubr.bf16.gmra.mrb[0].mxu0 %v1655
    %v1839 = vpop.f32.mrb[0].mxu0
    %v1840 = vadd.f32 %v1648, %v1839
    %v1841 = vpop.f32.mrb[0].mxu0
    %v1842 = vpop.f32.mrb[0].mxu0
    %v1843 = vpop.f32.mrb[0].mxu0
    %1844 = vdwg.mxu0
    %1845 = vmatprep.subr.bf16.mxu0 0
    %1846 = vmatpush1.bf16.msra.mxu0 %v1773
    %1847 = vmatprep.subr.bf16.mxu0 0
    %1848 = vmatpush1.bf16.msra.mxu0 %v1774
    %1849 = vmatprep.subr.bf16.mxu0 0
    %1850 = vmatpush1.bf16.msra.mxu0 %v1775
    %1851 = vmatprep.subr.bf16.mxu0 0
    %1852 = vmatpush1.bf16.msra.mxu0 %v1776
    %1853 = vmatprep.subr.bf16.mxu0 0
    %1854 = vmatpush1.bf16.msra.mxu0 %v1777
    %1855 = vmatprep.subr.bf16.mxu0 0
    %1856 = vmatpush1.bf16.msra.mxu0 %v1778
    %1857 = vmatprep.subr.bf16.mxu0 0
    %1858 = vmatpush1.bf16.msra.mxu0 %v1779
    %1859 = vmatprep.subr.bf16.mxu0 0
    %1860 = vmatpush1.bf16.msra.mxu0 %v1780
    %1861 = vmatprep.subr.bf16.mxu0 0
    %1862 = vmatpush1.bf16.msra.mxu0 0
    %1863 = vmatprep.subr.bf16.mxu0 0
    %1864 = vmatpush1.bf16.msra.mxu0 0
    %1865 = vmatprep.subr.bf16.mxu0 0
    %1866 = vmatpush1.bf16.msra.mxu0 0
    %1867 = vmatprep.subr.bf16.mxu0 0
    %1868 = vmatpush1.bf16.msra.mxu0 0
    %1869 = vmatprep.subr.bf16.mxu0 0
    %1870 = vmatpush1.bf16.msra.mxu0 0
    %1871 = vmatprep.subr.bf16.mxu0 0
    %1872 = vmatpush1.bf16.msra.mxu0 0
    %1873 = vmatprep.subr.bf16.mxu0 0
    %1874 = vmatpush1.bf16.msra.mxu0 0
    %1875 = vmatprep.subr.bf16.mxu0 0
    %1876 = vmatpush1.bf16.msra.mxu0 0
    %1877 = vmatprep.mubr.bf16.mxu0 0
    %1878 = vmatmul.mubr.bf16.gmra.mrb[0].mxu0 %v1657
    %v1879 = vpop.f32.mrb[0].mxu0
    %v1880 = vadd.f32 %v1840, %v1879
    %v1881 = vpop.f32.mrb[0].mxu0
    %v1882 = vpop.f32.mrb[0].mxu0
    %v1883 = vpop.f32.mrb[0].mxu0
    %1884 = vdwg.mxu0
    %v1885 = vmax.f32 %v1880, 0.0
    %v1886 = vpack.c.bf16 %v1885, %v1885
    %v1887 = vld [vmem:[#allocation12] sm:$0xf]
    %v1888 = vld [vmem:[#allocation12 + $0x4] sm:$0xf]
    %v1889 = vld [vmem:[#allocation12 + $0x8] sm:$0xf]
    %v1890 = vld [vmem:[#allocation12 + $0xc] sm:$0xf]
    %v1891 = vld [vmem:[#allocation12 + $0x10] sm:$0xf]
    %v1892 = vld [vmem:[#allocation12 + $0x14] sm:$0xf]
    %v1893 = vld [vmem:[#allocation12 + $0x18] sm:$0xf]
    %v1894 = vld [vmem:[#allocation12 + $0x1c] sm:$0xf]
    %v1895 = vld [vmem:[#allocation12 + $0x20] sm:$0xf]
    %v1896 = vld [vmem:[#allocation12 + $0x24] sm:$0xf]
    %v1897 = vld [vmem:[#allocation12 + $0x28] sm:$0xf]
    %v1898 = vld [vmem:[#allocation12 + $0x2c] sm:$0xf]
    %v1899 = vld [vmem:[#allocation12 + $0x30] sm:$0xf]
    %v1900 = vld [vmem:[#allocation12 + $0x34] sm:$0xf]
    %v1901 = vld [vmem:[#allocation12 + $0x38] sm:$0xf]
    %v1902 = vld [vmem:[#allocation12 + $0x3c] sm:$0xf]
    %v1903 = vld [vmem:[%s10] sm:$0x1]
    %v1905 = vlaneseq
    %v1906 = vshrl.u32 %v1905, 7
    %v1907 = vsub.s32 0, %v1906
    %v1908 = vrot.slane %v1903, %v1907
    %v1926 = vunpack.c.l.b16 %v1887
    %v1927 = vunpack.c.l.b16 %v1888
    %v1928 = vunpack.c.l.b16 %v1889
    %v1929 = vunpack.c.l.b16 %v1890
    %v1930 = vunpack.c.l.b16 %v1891
    %v1931 = vunpack.c.l.b16 %v1892
    %v1932 = vunpack.c.l.b16 %v1893
    %v1933 = vunpack.c.l.b16 %v1894
    %v1934 = vunpack.c.l.b16 %v1895
    %v1935 = vunpack.c.l.b16 %v1896
    %v1936 = vunpack.c.l.b16 %v1897
    %v1937 = vunpack.c.l.b16 %v1898
    %v1938 = vunpack.c.l.b16 %v1899
    %v1939 = vunpack.c.l.b16 %v1900
    %v1940 = vunpack.c.l.b16 %v1901
    %v1941 = vunpack.c.l.b16 %v1902
    %v1942 = vpack.c.b16 %v1927, %v1926
    %v1943 = vpack.c.b16 %v1929, %v1928
    %v1944 = vpack.c.b16 %v1931, %v1930
    %v1945 = vpack.c.b16 %v1933, %v1932
    %v1946 = vpack.c.b16 %v1935, %v1934
    %v1947 = vpack.c.b16 %v1937, %v1936
    %v1948 = vpack.c.b16 %v1939, %v1938
    %v1949 = vpack.c.b16 %v1941, %v1940
    %1958 = vmatprep.subr.bf16.mxu0 0
    %1959 = vmatpush1.bf16.msra.mxu0 %v1942
    %1960 = vmatprep.subr.bf16.mxu0 0
    %1961 = vmatpush1.bf16.msra.mxu0 %v1943
    %1962 = vmatprep.subr.bf16.mxu0 0
    %1963 = vmatpush1.bf16.msra.mxu0 %v1944
    %1964 = vmatprep.subr.bf16.mxu0 0
    %1965 = vmatpush1.bf16.msra.mxu0 %v1945
    %1966 = vmatprep.subr.bf16.mxu0 0
    %1967 = vmatpush1.bf16.msra.mxu0 %v1946
    %1968 = vmatprep.subr.bf16.mxu0 0
    %1969 = vmatpush1.bf16.msra.mxu0 %v1947
    %1970 = vmatprep.subr.bf16.mxu0 0
    %1971 = vmatpush1.bf16.msra.mxu0 %v1948
    %1972 = vmatprep.subr.bf16.mxu0 0
    %1973 = vmatpush1.bf16.msra.mxu0 %v1949
    %1974 = vmatprep.subr.bf16.mxu0 0
    %1975 = vmatpush1.bf16.msra.mxu0 0
    %1976 = vmatprep.subr.bf16.mxu0 0
    %1977 = vmatpush1.bf16.msra.mxu0 0
    %1978 = vmatprep.subr.bf16.mxu0 0
    %1979 = vmatpush1.bf16.msra.mxu0 0
    %1980 = vmatprep.subr.bf16.mxu0 0
    %1981 = vmatpush1.bf16.msra.mxu0 0
    %1982 = vmatprep.subr.bf16.mxu0 0
    %1983 = vmatpush1.bf16.msra.mxu0 0
    %1984 = vmatprep.subr.bf16.mxu0 0
    %1985 = vmatpush1.bf16.msra.mxu0 0
    %1986 = vmatprep.subr.bf16.mxu0 0
    %1987 = vmatpush1.bf16.msra.mxu0 0
    %1988 = vmatprep.subr.bf16.mxu0 0
    %1989 = vmatpush1.bf16.msra.mxu0 0
    %1990 = vmatprep.mubr.bf16.mxu0 0
    %1991 = vmatmul.mubr.bf16.gmra.mrb[0].mxu0 %v1886
    %v1992 = vpop.f32.mrb[0].mxu0
    %v1993 = vadd.f32 %v1908, %v1992
    %v1994 = vpop.f32.mrb[0].mxu0
    %v1995 = vpop.f32.mrb[0].mxu0
    %v1996 = vpop.f32.mrb[0].mxu0
    %1997 = vdwg.mxu0
    %1998 = vst [vmem:[#allocation14] sm:$0xff] %v1993
    // Predicated region
    $region70: #{tpu_custom_call.1} parent=1 // pred_check
      _
    $region71: #{tpu_custom_call.1} parent=1 // pred_check_branch
      %2000 = sbr.rel (0) target = $region73
    $region72: #{tpu_custom_call.1} parent=1 // pred_region
      %s2002 = ssub.s32 128, 128
      %2003 = vsyncadd [#allocation5], %s2002
      %s2005 = sshll.u32 [#allocation14], 4
      %s2006 = int_to_ptr.vmem [resolvable:$true] %s2005
      %2008 = dma.vmem_to_hbm [thread:$0]  %s2006, 128, %s11, [#allocation5]
    $region73: #{tpu_custom_call.1} parent=1 // pred_fallthru
      _
    // Predicated region
    $region74: #{tpu_custom_call.1} parent=1 // pred_check
      _
    $region75: #{tpu_custom_call.1} parent=1 // pred_check_branch
      %2010 = sbr.rel (0) target = $region77
    $region76: #{tpu_custom_call.1} parent=1 // pred_region
      %2011 = dma.done [#allocation5], 128
    $region77: #{tpu_custom_call.1} parent=1 // pred_fallthru
      _
    %2012 = vsyncpa [#allocation4], 1
    %2013 = vsyncpa [#allocation7], 1
    %2014 = vsyncpa [#allocation10], 1
    %2015 = vsyncpa [#allocation13], 1
    %2016 = vsyncpa [#allocation5], 1

</llo_original>
